<compile_context>
chip_gen: v6e
topology: v6e:2x2x1
jax: 0.10.0
libtpu: 0.0.40
codegen_flags: <defaults>
</compile_context>

<pallas_src>
import jax
import jax.numpy as jnp
import numpy as np
from jax.experimental import pallas as pl
from jax.experimental.pallas import tpu as pltpu


def cnn_kernel(x_ref, wc_ref, cb_ref, fw_ref, fb_ref, out_ref):
    """One grid step = one batch tile; conv + ReLU + FC fully fused.

    x_ref  : (TILE_N, 256) bf16   flattened NCHW image, chw padded 192 -> 256
    wc_ref : (9, 256, 128) bf16   per-group conv weight with im2col folded in
    cb_ref : (1, 128)      f32    conv bias tiled x4 (4 spatial positions per group)
    fw_ref : (9, 128, 128) bf16   FC weight, rows s_local*32+c, out lanes padded 10 -> 128
    fb_ref : (1, 128)      f32    FC bias, lane padded
    out_ref: (TILE_N, 128) f32    lane-padded logits (cols 0..9 valid)
    """
    xb = x_ref[...]                                   # (TILE_N, 256) bf16
    cb = cb_ref[...]                                  # (1, 128) f32
    n = x_ref.shape[0]
    acc = jnp.zeros((n, 128), jnp.float32)
    for g in range(wc_ref.shape[0]):                  # static unroll over 9 groups
        # fused im2col + conv: (TILE_N,256)@(256,128) on the MXU, f32 accumulate
        a = jnp.dot(xb, wc_ref[g], preferred_element_type=jnp.float32)
        a = jnp.maximum(a + cb, 0.0)                  # bias + ReLU in f32
        # fused FC contribution of this group's 4 spatial positions
        acc = acc + jnp.dot(a.astype(jnp.bfloat16), fw_ref[g],
                            preferred_element_type=jnp.float32)
    out_ref[...] = (acc + fb_ref[...]).astype(out_ref.dtype)   # single lane-dense store


def simple_cnn_forward(x, conv_w, conv_b, fc_w, fc_b, tile_n=512):
    """x: (N, 3, 8, 8) float32 NCHW.  Returns (N, 10) float32."""
    N, C, H, W = x.shape
    KH = KW = 3
    OH, OW = H - KH + 1, W - KW + 1          # 6, 6
    S = OH * OW                              # 36 spatial positions
    K = C * KH * KW                          # 27 patch depth
    C_out = conv_w.shape[0]                  # 32
    GROUP = 4                                # spatial positions per 128-lane group
    G = S // GROUP                           # 9 groups
    CHW = C * H * W                          # 192
    CHW_PAD = 256                            # lane-pad 192 -> 256 (2 full vregs)
    O_PAD = 128                              # FC output lanes padded 10 -> 128

    # --- batch tiling: always >= 2 grid steps so v7x's two TensorCores both get work
    if N <= tile_n:
        TILE_N = max(8, (((N + 1) // 2) + 7) // 8 * 8)
    else:
        TILE_N = tile_n
    num_tiles = max(2, pl.cdiv(N, TILE_N))
    N_pad = num_tiles * TILE_N

    # --- flattened image, bf16 (only HBM-streamed tensor besides the output)
    xf = x.reshape(N, CHW)
    xf = jnp.pad(xf, ((0, N_pad - N), (0, CHW_PAD - CHW))).astype(jnp.bfloat16)

    # --- conv weight with im2col folded in:
    # act[n, s, c_out] = sum_p xf[n, p] * W_conv[s, p, c_out],
    # W_conv[s, c*64+(oh+kh)*8+(ow+kw), c_out] = conv_w[c_out, c, kh, kw]
    cw_k = conv_w.reshape(C_out, K).T                       # (27, 32), row = c*9+kh*3+kw
    onehot = np.zeros((S, CHW, K), np.float32)
    for s in range(S):
        oh, ow = divmod(s, OW)
        for c in range(C):
            for kh in range(KH):
                for kw in range(KW):
                    k = c * KH * KW + kh * KW + kw
                    onehot[s, c * H * W + (oh + kh) * W + (ow + kw), k] = 1.0
    w_conv = jnp.einsum("spk,ko->spo", onehot, cw_k)        # (36, 192, 32)
    # group 4 spatial positions per 128-lane block: [g, chw, s_local*32 + c_out]
    w_grp = w_conv.reshape(G, GROUP, CHW, C_out).transpose(0, 2, 1, 3)
    w_grp = w_grp.reshape(G, CHW, GROUP * C_out)
    w_grp = jnp.pad(w_grp, ((0, 0), (0, CHW_PAD - CHW), (0, 0))).astype(jnp.bfloat16)

    cb4 = jnp.tile(conv_b.reshape(1, C_out), (1, GROUP)).astype(jnp.float32)   # (1, 128)

    # --- FC weight: PyTorch flatten index is c_out*36 + s; reorder rows to s*32 + c_out
    # (matching the kernel's activation column order), pad 10 output cols to 128 lanes,
    # and split into 9 row-groups of 128 for the fused per-group accumulation.
    fw = fc_w.reshape(10, C_out, S).transpose(2, 1, 0).reshape(S * C_out, 10)  # (1152, 10)
    fw = jnp.pad(fw, ((0, 0), (0, O_PAD - 10)))                                # (1152, 128)
    fw = fw.reshape(G, GROUP * C_out, O_PAD).astype(jnp.bfloat16)              # (9, 128, 128)
    fb = jnp.pad(fc_b.reshape(1, 10), ((0, 0), (0, O_PAD - 10))).astype(jnp.float32)

    out = pl.pallas_call(
        cnn_kernel,
        out_shape=jax.ShapeDtypeStruct((N_pad, O_PAD), jnp.float32),
        grid=(num_tiles,),
        in_specs=[
            pl.BlockSpec((TILE_N, CHW_PAD), lambda i: (i, 0)),
            pl.BlockSpec((G, CHW_PAD, GROUP * C_out), lambda i: (0, 0, 0)),
            pl.BlockSpec((1, GROUP * C_out), lambda i: (0, 0)),
            pl.BlockSpec((G, GROUP * C_out, O_PAD), lambda i: (0, 0, 0)),
            pl.BlockSpec((1, O_PAD), lambda i: (0, 0)),
        ],
        out_specs=pl.BlockSpec((TILE_N, O_PAD), lambda i: (i, 0)),
        compiler_params=pltpu.CompilerParams(dimension_semantics=("parallel",)),
    )(xf, w_grp, cb4, fw, fb)
    return out[:N, :10]


def init_params(key):
    """Deterministic PyTorch-like (uniform +/- 1/sqrt(fan_in)) init."""
    k1, k2, k3, k4 = jax.random.split(key, 4)
    fan_conv = 3 * 3 * 3
    fan_fc = 32 * 6 * 6
    conv_w = jax.random.uniform(k1, (32, 3, 3, 3), jnp.float32,
                                -1.0 / np.sqrt(fan_conv), 1.0 / np.sqrt(fan_conv))
    conv_b = jax.random.uniform(k2, (32,), jnp.float32,
                                -1.0 / np.sqrt(fan_conv), 1.0 / np.sqrt(fan_conv))
    fc_w = jax.random.uniform(k3, (10, fan_fc), jnp.float32,
                              -1.0 / np.sqrt(fan_fc), 1.0 / np.sqrt(fan_fc))
    fc_b = jax.random.uniform(k4, (10,), jnp.float32,
                              -1.0 / np.sqrt(fan_fc), 1.0 / np.sqrt(fan_fc))
    return conv_w, conv_b, fc_w, fc_b


def reference_forward(x, conv_w, conv_b, fc_w, fc_b):
    """Pure-JAX reference matching PyTorch SimpleCNN.forward."""
    conv = jax.lax.conv_general_dilated(
        x, conv_w, window_strides=(1, 1), padding="VALID",
        dimension_numbers=("NCHW", "OIHW", "NCHW"))
    act = jnp.maximum(conv + conv_b[None, :, None, None], 0.0)
    flat = act.reshape(x.shape[0], -1)               # channel-major flatten, like torch .view
    return flat @ fc_w.T + fc_b[None, :]


if __name__ == "__main__":
    key = jax.random.PRNGKey(0)
    kx, kp = jax.random.split(key)

    N = 2
    x = jax.random.normal(kx, (N, 3, 8, 8), jnp.float32)   # NCHW, 8x8 -> conv 6x6
    conv_w, conv_b, fc_w, fc_b = init_params(kp)

    out = simple_cnn_forward(x, conv_w, conv_b, fc_w, fc_b)
    out = jax.block_until_ready(out)

    ref = reference_forward(x, conv_w, conv_b, fc_w, fc_b)
    # bf16 MXU operands (f32 accumulation) vs f32 reference -> ~1e-2-level tolerance
    np.testing.assert_allclose(np.asarray(out), np.asarray(ref), rtol=2e-2, atol=2e-2)

    print("KERNEL_OK")
</pallas_src>

<mosaic_0001>
module attributes {stable_mosaic.version = 11 : i64} {
  func.func @cnn_kernel(%arg0: i32, %arg1: memref<8x256xbf16, #tpu.memory_space<vmem>>, %arg2: memref<9x256x128xbf16, #tpu.memory_space<vmem>>, %arg3: memref<1x128xf32, #tpu.memory_space<vmem>>, %arg4: memref<9x128x128xbf16, #tpu.memory_space<vmem>>, %arg5: memref<1x128xf32, #tpu.memory_space<vmem>>, %arg6: memref<8x128xf32, #tpu.memory_space<vmem>>) attributes {dimension_semantics = [#tpu.dimension_semantics<parallel>], iteration_bounds = array<i64: 2>, scalar_prefetch = 0 : i64, scratch_operands = 0 : i64, tpu.core_type = #tpu.core_type<tc>, window_params = [{transform_indices = @transform_0, window_bounds = array<i64: 8, 256>}, {pipeline_mode = #tpu.pipeline_mode<synchronous>, transform_indices = @transform_1, window_bounds = array<i64: 9, 256, 128>}, {pipeline_mode = #tpu.pipeline_mode<synchronous>, transform_indices = @transform_2, window_bounds = array<i64: 1, 128>}, {pipeline_mode = #tpu.pipeline_mode<synchronous>, transform_indices = @transform_3, window_bounds = array<i64: 9, 128, 128>}, {pipeline_mode = #tpu.pipeline_mode<synchronous>, transform_indices = @transform_4, window_bounds = array<i64: 1, 128>}, {transform_indices = @transform_5, window_bounds = array<i64: 8, 128>}]} {
    %c0 = arith.constant 0 : index
    %c0_0 = arith.constant 0 : index
    %0 = vector.load %arg1[%c0, %c0_0] : memref<8x256xbf16, #tpu.memory_space<vmem>>, vector<8x256xbf16>
    %c0_1 = arith.constant 0 : index
    %c0_2 = arith.constant 0 : index
    %1 = vector.load %arg3[%c0_1, %c0_2] : memref<1x128xf32, #tpu.memory_space<vmem>>, vector<1x128xf32>
    %cst = arith.constant 0.000000e+00 : f32
    %2 = vector.broadcast %cst : f32 to vector<8x128xf32>
    %c0_3 = arith.constant 0 : index
    %c0_4 = arith.constant 0 : index
    %c0_5 = arith.constant 0 : index
    %3 = vector.load %arg2[%c0_3, %c0_4, %c0_5] : memref<9x256x128xbf16, #tpu.memory_space<vmem>>, vector<1x256x128xbf16>
    %4 = vector.shape_cast %3 : vector<1x256x128xbf16> to vector<256x128xbf16>
    %cst_6 = arith.constant dense<0.000000e+00> : vector<8x128xf32>
    %5 = tpu.matmul %0, %4, %cst_6 {dimension_numbers = #tpu.dot_dimension_numbers<[1], [0], [0], [1], [0, 0, 1, 1], [], []>} : vector<8x256xbf16>, vector<256x128xbf16>, vector<8x128xf32> -> vector<8x128xf32>
    %6 = vector.broadcast %1 : vector<1x128xf32> to vector<8x128xf32>
    %7 = arith.addf %5, %6 : vector<8x128xf32>
    %cst_7 = arith.constant 0.000000e+00 : f32
    %8 = vector.broadcast %cst_7 : f32 to vector<8x128xf32>
    %9 = arith.maximumf %7, %8 : vector<8x128xf32>
    %10 = arith.truncf %9 : vector<8x128xf32> to vector<8x128xbf16>
    %c0_8 = arith.constant 0 : index
    %c0_9 = arith.constant 0 : index
    %c0_10 = arith.constant 0 : index
    %11 = vector.load %arg4[%c0_8, %c0_9, %c0_10] : memref<9x128x128xbf16, #tpu.memory_space<vmem>>, vector<1x128x128xbf16>
    %12 = vector.shape_cast %11 : vector<1x128x128xbf16> to vector<128x128xbf16>
    %cst_11 = arith.constant dense<0.000000e+00> : vector<8x128xf32>
    %13 = tpu.matmul %10, %12, %cst_11 {dimension_numbers = #tpu.dot_dimension_numbers<[1], [0], [0], [1], [0, 0, 1, 1], [], []>} : vector<8x128xbf16>, vector<128x128xbf16>, vector<8x128xf32> -> vector<8x128xf32>
    %14 = arith.addf %2, %13 : vector<8x128xf32>
    %c1 = arith.constant 1 : index
    %c0_12 = arith.constant 0 : index
    %c0_13 = arith.constant 0 : index
    %15 = vector.load %arg2[%c1, %c0_12, %c0_13] : memref<9x256x128xbf16, #tpu.memory_space<vmem>>, vector<1x256x128xbf16>
    %16 = vector.shape_cast %15 : vector<1x256x128xbf16> to vector<256x128xbf16>
    %cst_14 = arith.constant dense<0.000000e+00> : vector<8x128xf32>
    %17 = tpu.matmul %0, %16, %cst_14 {dimension_numbers = #tpu.dot_dimension_numbers<[1], [0], [0], [1], [0, 0, 1, 1], [], []>} : vector<8x256xbf16>, vector<256x128xbf16>, vector<8x128xf32> -> vector<8x128xf32>
    %18 = vector.broadcast %1 : vector<1x128xf32> to vector<8x128xf32>
    %19 = arith.addf %17, %18 : vector<8x128xf32>
    %cst_15 = arith.constant 0.000000e+00 : f32
    %20 = vector.broadcast %cst_15 : f32 to vector<8x128xf32>
    %21 = arith.maximumf %19, %20 : vector<8x128xf32>
    %22 = arith.truncf %21 : vector<8x128xf32> to vector<8x128xbf16>
    %c1_16 = arith.constant 1 : index
    %c0_17 = arith.constant 0 : index
    %c0_18 = arith.constant 0 : index
    %23 = vector.load %arg4[%c1_16, %c0_17, %c0_18] : memref<9x128x128xbf16, #tpu.memory_space<vmem>>, vector<1x128x128xbf16>
    %24 = vector.shape_cast %23 : vector<1x128x128xbf16> to vector<128x128xbf16>
    %cst_19 = arith.constant dense<0.000000e+00> : vector<8x128xf32>
    %25 = tpu.matmul %22, %24, %cst_19 {dimension_numbers = #tpu.dot_dimension_numbers<[1], [0], [0], [1], [0, 0, 1, 1], [], []>} : vector<8x128xbf16>, vector<128x128xbf16>, vector<8x128xf32> -> vector<8x128xf32>
    %26 = arith.addf %14, %25 : vector<8x128xf32>
    %c2 = arith.constant 2 : index
    %c0_20 = arith.constant 0 : index
    %c0_21 = arith.constant 0 : index
    %27 = vector.load %arg2[%c2, %c0_20, %c0_21] : memref<9x256x128xbf16, #tpu.memory_space<vmem>>, vector<1x256x128xbf16>
    %28 = vector.shape_cast %27 : vector<1x256x128xbf16> to vector<256x128xbf16>
    %cst_22 = arith.constant dense<0.000000e+00> : vector<8x128xf32>
    %29 = tpu.matmul %0, %28, %cst_22 {dimension_numbers = #tpu.dot_dimension_numbers<[1], [0], [0], [1], [0, 0, 1, 1], [], []>} : vector<8x256xbf16>, vector<256x128xbf16>, vector<8x128xf32> -> vector<8x128xf32>
    %30 = vector.broadcast %1 : vector<1x128xf32> to vector<8x128xf32>
    %31 = arith.addf %29, %30 : vector<8x128xf32>
    %cst_23 = arith.constant 0.000000e+00 : f32
    %32 = vector.broadcast %cst_23 : f32 to vector<8x128xf32>
    %33 = arith.maximumf %31, %32 : vector<8x128xf32>
    %34 = arith.truncf %33 : vector<8x128xf32> to vector<8x128xbf16>
    %c2_24 = arith.constant 2 : index
    %c0_25 = arith.constant 0 : index
    %c0_26 = arith.constant 0 : index
    %35 = vector.load %arg4[%c2_24, %c0_25, %c0_26] : memref<9x128x128xbf16, #tpu.memory_space<vmem>>, vector<1x128x128xbf16>
    %36 = vector.shape_cast %35 : vector<1x128x128xbf16> to vector<128x128xbf16>
    %cst_27 = arith.constant dense<0.000000e+00> : vector<8x128xf32>
    %37 = tpu.matmul %34, %36, %cst_27 {dimension_numbers = #tpu.dot_dimension_numbers<[1], [0], [0], [1], [0, 0, 1, 1], [], []>} : vector<8x128xbf16>, vector<128x128xbf16>, vector<8x128xf32> -> vector<8x128xf32>
    %38 = arith.addf %26, %37 : vector<8x128xf32>
    %c3 = arith.constant 3 : index
    %c0_28 = arith.constant 0 : index
    %c0_29 = arith.constant 0 : index
    %39 = vector.load %arg2[%c3, %c0_28, %c0_29] : memref<9x256x128xbf16, #tpu.memory_space<vmem>>, vector<1x256x128xbf16>
    %40 = vector.shape_cast %39 : vector<1x256x128xbf16> to vector<256x128xbf16>
    %cst_30 = arith.constant dense<0.000000e+00> : vector<8x128xf32>
    %41 = tpu.matmul %0, %40, %cst_30 {dimension_numbers = #tpu.dot_dimension_numbers<[1], [0], [0], [1], [0, 0, 1, 1], [], []>} : vector<8x256xbf16>, vector<256x128xbf16>, vector<8x128xf32> -> vector<8x128xf32>
    %42 = vector.broadcast %1 : vector<1x128xf32> to vector<8x128xf32>
    %43 = arith.addf %41, %42 : vector<8x128xf32>
    %cst_31 = arith.constant 0.000000e+00 : f32
    %44 = vector.broadcast %cst_31 : f32 to vector<8x128xf32>
    %45 = arith.maximumf %43, %44 : vector<8x128xf32>
    %46 = arith.truncf %45 : vector<8x128xf32> to vector<8x128xbf16>
    %c3_32 = arith.constant 3 : index
    %c0_33 = arith.constant 0 : index
    %c0_34 = arith.constant 0 : index
    %47 = vector.load %arg4[%c3_32, %c0_33, %c0_34] : memref<9x128x128xbf16, #tpu.memory_space<vmem>>, vector<1x128x128xbf16>
    %48 = vector.shape_cast %47 : vector<1x128x128xbf16> to vector<128x128xbf16>
    %cst_35 = arith.constant dense<0.000000e+00> : vector<8x128xf32>
    %49 = tpu.matmul %46, %48, %cst_35 {dimension_numbers = #tpu.dot_dimension_numbers<[1], [0], [0], [1], [0, 0, 1, 1], [], []>} : vector<8x128xbf16>, vector<128x128xbf16>, vector<8x128xf32> -> vector<8x128xf32>
    %50 = arith.addf %38, %49 : vector<8x128xf32>
    %c4 = arith.constant 4 : index
    %c0_36 = arith.constant 0 : index
    %c0_37 = arith.constant 0 : index
    %51 = vector.load %arg2[%c4, %c0_36, %c0_37] : memref<9x256x128xbf16, #tpu.memory_space<vmem>>, vector<1x256x128xbf16>
    %52 = vector.shape_cast %51 : vector<1x256x128xbf16> to vector<256x128xbf16>
    %cst_38 = arith.constant dense<0.000000e+00> : vector<8x128xf32>
    %53 = tpu.matmul %0, %52, %cst_38 {dimension_numbers = #tpu.dot_dimension_numbers<[1], [0], [0], [1], [0, 0, 1, 1], [], []>} : vector<8x256xbf16>, vector<256x128xbf16>, vector<8x128xf32> -> vector<8x128xf32>
    %54 = vector.broadcast %1 : vector<1x128xf32> to vector<8x128xf32>
    %55 = arith.addf %53, %54 : vector<8x128xf32>
    %cst_39 = arith.constant 0.000000e+00 : f32
    %56 = vector.broadcast %cst_39 : f32 to vector<8x128xf32>
    %57 = arith.maximumf %55, %56 : vector<8x128xf32>
    %58 = arith.truncf %57 : vector<8x128xf32> to vector<8x128xbf16>
    %c4_40 = arith.constant 4 : index
    %c0_41 = arith.constant 0 : index
    %c0_42 = arith.constant 0 : index
    %59 = vector.load %arg4[%c4_40, %c0_41, %c0_42] : memref<9x128x128xbf16, #tpu.memory_space<vmem>>, vector<1x128x128xbf16>
    %60 = vector.shape_cast %59 : vector<1x128x128xbf16> to vector<128x128xbf16>
    %cst_43 = arith.constant dense<0.000000e+00> : vector<8x128xf32>
    %61 = tpu.matmul %58, %60, %cst_43 {dimension_numbers = #tpu.dot_dimension_numbers<[1], [0], [0], [1], [0, 0, 1, 1], [], []>} : vector<8x128xbf16>, vector<128x128xbf16>, vector<8x128xf32> -> vector<8x128xf32>
    %62 = arith.addf %50, %61 : vector<8x128xf32>
    %c5 = arith.constant 5 : index
    %c0_44 = arith.constant 0 : index
    %c0_45 = arith.constant 0 : index
    %63 = vector.load %arg2[%c5, %c0_44, %c0_45] : memref<9x256x128xbf16, #tpu.memory_space<vmem>>, vector<1x256x128xbf16>
    %64 = vector.shape_cast %63 : vector<1x256x128xbf16> to vector<256x128xbf16>
    %cst_46 = arith.constant dense<0.000000e+00> : vector<8x128xf32>
    %65 = tpu.matmul %0, %64, %cst_46 {dimension_numbers = #tpu.dot_dimension_numbers<[1], [0], [0], [1], [0, 0, 1, 1], [], []>} : vector<8x256xbf16>, vector<256x128xbf16>, vector<8x128xf32> -> vector<8x128xf32>
    %66 = vector.broadcast %1 : vector<1x128xf32> to vector<8x128xf32>
    %67 = arith.addf %65, %66 : vector<8x128xf32>
    %cst_47 = arith.constant 0.000000e+00 : f32
    %68 = vector.broadcast %cst_47 : f32 to vector<8x128xf32>
    %69 = arith.maximumf %67, %68 : vector<8x128xf32>
    %70 = arith.truncf %69 : vector<8x128xf32> to vector<8x128xbf16>
    %c5_48 = arith.constant 5 : index
    %c0_49 = arith.constant 0 : index
    %c0_50 = arith.constant 0 : index
    %71 = vector.load %arg4[%c5_48, %c0_49, %c0_50] : memref<9x128x128xbf16, #tpu.memory_space<vmem>>, vector<1x128x128xbf16>
    %72 = vector.shape_cast %71 : vector<1x128x128xbf16> to vector<128x128xbf16>
    %cst_51 = arith.constant dense<0.000000e+00> : vector<8x128xf32>
    %73 = tpu.matmul %70, %72, %cst_51 {dimension_numbers = #tpu.dot_dimension_numbers<[1], [0], [0], [1], [0, 0, 1, 1], [], []>} : vector<8x128xbf16>, vector<128x128xbf16>, vector<8x128xf32> -> vector<8x128xf32>
    %74 = arith.addf %62, %73 : vector<8x128xf32>
    %c6 = arith.constant 6 : index
    %c0_52 = arith.constant 0 : index
    %c0_53 = arith.constant 0 : index
    %75 = vector.load %arg2[%c6, %c0_52, %c0_53] : memref<9x256x128xbf16, #tpu.memory_space<vmem>>, vector<1x256x128xbf16>
    %76 = vector.shape_cast %75 : vector<1x256x128xbf16> to vector<256x128xbf16>
    %cst_54 = arith.constant dense<0.000000e+00> : vector<8x128xf32>
    %77 = tpu.matmul %0, %76, %cst_54 {dimension_numbers = #tpu.dot_dimension_numbers<[1], [0], [0], [1], [0, 0, 1, 1], [], []>} : vector<8x256xbf16>, vector<256x128xbf16>, vector<8x128xf32> -> vector<8x128xf32>
    %78 = vector.broadcast %1 : vector<1x128xf32> to vector<8x128xf32>
    %79 = arith.addf %77, %78 : vector<8x128xf32>
    %cst_55 = arith.constant 0.000000e+00 : f32
    %80 = vector.broadcast %cst_55 : f32 to vector<8x128xf32>
    %81 = arith.maximumf %79, %80 : vector<8x128xf32>
    %82 = arith.truncf %81 : vector<8x128xf32> to vector<8x128xbf16>
    %c6_56 = arith.constant 6 : index
    %c0_57 = arith.constant 0 : index
    %c0_58 = arith.constant 0 : index
    %83 = vector.load %arg4[%c6_56, %c0_57, %c0_58] : memref<9x128x128xbf16, #tpu.memory_space<vmem>>, vector<1x128x128xbf16>
    %84 = vector.shape_cast %83 : vector<1x128x128xbf16> to vector<128x128xbf16>
    %cst_59 = arith.constant dense<0.000000e+00> : vector<8x128xf32>
    %85 = tpu.matmul %82, %84, %cst_59 {dimension_numbers = #tpu.dot_dimension_numbers<[1], [0], [0], [1], [0, 0, 1, 1], [], []>} : vector<8x128xbf16>, vector<128x128xbf16>, vector<8x128xf32> -> vector<8x128xf32>
    %86 = arith.addf %74, %85 : vector<8x128xf32>
    %c7 = arith.constant 7 : index
    %c0_60 = arith.constant 0 : index
    %c0_61 = arith.constant 0 : index
    %87 = vector.load %arg2[%c7, %c0_60, %c0_61] : memref<9x256x128xbf16, #tpu.memory_space<vmem>>, vector<1x256x128xbf16>
    %88 = vector.shape_cast %87 : vector<1x256x128xbf16> to vector<256x128xbf16>
    %cst_62 = arith.constant dense<0.000000e+00> : vector<8x128xf32>
    %89 = tpu.matmul %0, %88, %cst_62 {dimension_numbers = #tpu.dot_dimension_numbers<[1], [0], [0], [1], [0, 0, 1, 1], [], []>} : vector<8x256xbf16>, vector<256x128xbf16>, vector<8x128xf32> -> vector<8x128xf32>
    %90 = vector.broadcast %1 : vector<1x128xf32> to vector<8x128xf32>
    %91 = arith.addf %89, %90 : vector<8x128xf32>
    %cst_63 = arith.constant 0.000000e+00 : f32
    %92 = vector.broadcast %cst_63 : f32 to vector<8x128xf32>
    %93 = arith.maximumf %91, %92 : vector<8x128xf32>
    %94 = arith.truncf %93 : vector<8x128xf32> to vector<8x128xbf16>
    %c7_64 = arith.constant 7 : index
    %c0_65 = arith.constant 0 : index
    %c0_66 = arith.constant 0 : index
    %95 = vector.load %arg4[%c7_64, %c0_65, %c0_66] : memref<9x128x128xbf16, #tpu.memory_space<vmem>>, vector<1x128x128xbf16>
    %96 = vector.shape_cast %95 : vector<1x128x128xbf16> to vector<128x128xbf16>
    %cst_67 = arith.constant dense<0.000000e+00> : vector<8x128xf32>
    %97 = tpu.matmul %94, %96, %cst_67 {dimension_numbers = #tpu.dot_dimension_numbers<[1], [0], [0], [1], [0, 0, 1, 1], [], []>} : vector<8x128xbf16>, vector<128x128xbf16>, vector<8x128xf32> -> vector<8x128xf32>
    %98 = arith.addf %86, %97 : vector<8x128xf32>
    %c8 = arith.constant 8 : index
    %c0_68 = arith.constant 0 : index
    %c0_69 = arith.constant 0 : index
    %99 = vector.load %arg2[%c8, %c0_68, %c0_69] : memref<9x256x128xbf16, #tpu.memory_space<vmem>>, vector<1x256x128xbf16>
    %100 = vector.shape_cast %99 : vector<1x256x128xbf16> to vector<256x128xbf16>
    %cst_70 = arith.constant dense<0.000000e+00> : vector<8x128xf32>
    %101 = tpu.matmul %0, %100, %cst_70 {dimension_numbers = #tpu.dot_dimension_numbers<[1], [0], [0], [1], [0, 0, 1, 1], [], []>} : vector<8x256xbf16>, vector<256x128xbf16>, vector<8x128xf32> -> vector<8x128xf32>
    %102 = vector.broadcast %1 : vector<1x128xf32> to vector<8x128xf32>
    %103 = arith.addf %101, %102 : vector<8x128xf32>
    %cst_71 = arith.constant 0.000000e+00 : f32
    %104 = vector.broadcast %cst_71 : f32 to vector<8x128xf32>
    %105 = arith.maximumf %103, %104 : vector<8x128xf32>
    %106 = arith.truncf %105 : vector<8x128xf32> to vector<8x128xbf16>
    %c8_72 = arith.constant 8 : index
    %c0_73 = arith.constant 0 : index
    %c0_74 = arith.constant 0 : index
    %107 = vector.load %arg4[%c8_72, %c0_73, %c0_74] : memref<9x128x128xbf16, #tpu.memory_space<vmem>>, vector<1x128x128xbf16>
    %108 = vector.shape_cast %107 : vector<1x128x128xbf16> to vector<128x128xbf16>
    %cst_75 = arith.constant dense<0.000000e+00> : vector<8x128xf32>
    %109 = tpu.matmul %106, %108, %cst_75 {dimension_numbers = #tpu.dot_dimension_numbers<[1], [0], [0], [1], [0, 0, 1, 1], [], []>} : vector<8x128xbf16>, vector<128x128xbf16>, vector<8x128xf32> -> vector<8x128xf32>
    %110 = arith.addf %98, %109 : vector<8x128xf32>
    %c0_76 = arith.constant 0 : index
    %c0_77 = arith.constant 0 : index
    %111 = vector.load %arg5[%c0_76, %c0_77] : memref<1x128xf32, #tpu.memory_space<vmem>>, vector<1x128xf32>
    %112 = vector.broadcast %111 : vector<1x128xf32> to vector<8x128xf32>
    %113 = arith.addf %110, %112 : vector<8x128xf32>
    %c0_78 = arith.constant 0 : index
    %c0_79 = arith.constant 0 : index
    %114 = vector.load %arg6[%c0_78, %c0_79] : memref<8x128xf32, #tpu.memory_space<vmem>>, vector<8x128xf32>
    tpu.vector_store %arg6[%c0_78, %c0_79], %113 {strides = array<i32>} : memref<8x128xf32, #tpu.memory_space<vmem>>, vector<8x128xf32>,
    return
  }
  func.func @transform_0(%arg0: i32) -> (i32, i32) {
    %c0_i32 = arith.constant 0 : i32
    %c0_i32_0 = arith.constant 0 : i32
    return %arg0, %c0_i32 : i32, i32
  }
  func.func @transform_1(%arg0: i32) -> (i32, i32, i32) {
    %c0_i32 = arith.constant 0 : i32
    %c0_i32_0 = arith.constant 0 : i32
    %c0_i32_1 = arith.constant 0 : i32
    %c0_i32_2 = arith.constant 0 : i32
    return %c0_i32, %c0_i32_0, %c0_i32_1 : i32, i32, i32
  }
  func.func @transform_2(%arg0: i32) -> (i32, i32) {
    %c0_i32 = arith.constant 0 : i32
    %c0_i32_0 = arith.constant 0 : i32
    %c0_i32_1 = arith.constant 0 : i32
    return %c0_i32, %c0_i32_0 : i32, i32
  }
  func.func @transform_3(%arg0: i32) -> (i32, i32, i32) {
    %c0_i32 = arith.constant 0 : i32
    %c0_i32_0 = arith.constant 0 : i32
    %c0_i32_1 = arith.constant 0 : i32
    %c0_i32_2 = arith.constant 0 : i32
    return %c0_i32, %c0_i32_0, %c0_i32_1 : i32, i32, i32
  }
  func.func @transform_4(%arg0: i32) -> (i32, i32) {
    %c0_i32 = arith.constant 0 : i32
    %c0_i32_0 = arith.constant 0 : i32
    %c0_i32_1 = arith.constant 0 : i32
    return %c0_i32, %c0_i32_0 : i32, i32
  }
  func.func @transform_5(%arg0: i32) -> (i32, i32) {
    %c0_i32 = arith.constant 0 : i32
    %c0_i32_0 = arith.constant 0 : i32
    return %arg0, %c0_i32 : i32, i32
  }
}

</mosaic_0001>

<llo_original>
// kernel: tpu_custom_call.1
$region0: #{tpu_custom_call.1}
  #allocation0 [shape = 'u32[]', space=smem, size = 0x4, offset = 0x4, fixed_abs, tag = 'smem constant byte address 0x4 - core index']
  #allocation1 [shape = 'u32[144,128]{1,0:T(1,128)}', space=vmem, size = 0x12000, scoped, tag = 'internal scratch']
  %s0 = inlined_call_operand.hbm [shape: bf16[16,256], index: 0, kind: input, shape index: {}]
  %s1 = inlined_call_operand.hbm [shape: bf16[9,256,128], index: 1, kind: input, shape index: {}]
  %s2 = inlined_call_operand.vmem [shape: f32[1,128], index: 2, kind: input, shape index: {}]
  %s3 = inlined_call_operand.hbm [shape: bf16[9,128,128], index: 3, kind: input, shape index: {}]
  %s4 = inlined_call_operand.vmem [shape: f32[1,128], index: 4, kind: input, shape index: {}]
  %s5 = inlined_call_operand.hbm [shape: f32[16,128], index: 5, kind: output, shape index: {}]
  %s6 = sld [smem:[#allocation0]]
  $region65: #{tpu_custom_call.1} parent=0
    _
  %s8 = ssub.s32 1, %s6
  %s9 = scalar_select 0, %s8, %s6
  $region1: #{tpu_custom_call.1} parent=0
    #allocation2 [shape = 'u8[8192]{0}', space=vmem, size = 0x2000, scoped, tag = 'input window, operand 0']
    #allocation3 [shape = 's32[2]{0}', space=sflag, size = 0x8, scoped, tag = 'scoped memory for tpu_custom_call.1']
    #allocation4 [shape = 's32[2]{0}', space=sflag, size = 0x8, scoped, tag = 'scoped memory for tpu_custom_call.1']
    #allocation5 [shape = 'u8[589824]{0}', space=vmem, size = 0x90000, scoped, tag = 'input window, operand 1, single buffered']
    #allocation6 [shape = 's32[1]{0}', space=sflag, size = 0x4, scoped, tag = 'scoped memory for tpu_custom_call.1']
    #allocation7 [shape = 'u8[294912]{0}', space=vmem, size = 0x48000, scoped, tag = 'input window, operand 3, single buffered']
    #allocation8 [shape = 'u8[8192]{0}', space=vmem, size = 0x2000, scoped, tag = 'output window, operand 0']
    %10 = vsyncpa [#allocation3], 0
    %s11 = scalar_lea.sflag [#allocation3], 1
    %12 = vsyncpa %s11, 0
    %13 = vsyncpa [#allocation6], 0
    %14 = vsyncpa [#allocation4], 0
    %s15 = scalar_lea.sflag [#allocation4], 1
    %16 = vsyncpa %s15, 0
    loop: start=0, step=1, limit=4
    $region2: #{tpu_custom_call.1} parent=1 // loop_pre_header
      _
    $region3: #{tpu_custom_call.1} parent=1 // loop_header
      %s18 = sphi 0, %s22
      %p19 = scmp.ge.s32.totalorder %s18, 4
      %s28 = sphi 0, %s30
      %s31 = sphi 0, %s28
      %s32 = sphi 0, %s31
      %s48 = sphi 0, %s32
      %s52 = sphi 0, %s52
      %s54 = sphi 0, %s52
      %s55 = sphi 0, %s54
      %s69 = sphi 0, %s55
      %s73 = sphi 0, %s73
      %s75 = sphi 0, %s73
      %s76 = sphi 0, %s75
      %s90 = sphi 0, %s76
      %s94 = sphi 0, %s94
      %s96 = sphi 0, %s94
      %s97 = sphi 0, %s96
      %s111 = sphi 0, %s97
      %s115 = sphi 0, %s115
      %s117 = sphi 0, %s115
      %s118 = sphi 0, %s117
      %s132 = sphi 0, %s118
      %s138 = sphi 0, %s140
      %s141 = sphi 0, %s138
      %s142 = sphi 0, %s141
      %s158 = sphi 0, %s142
    $region4: #{tpu_custom_call.1} parent=1 // loop_header_branch
      %21 = sbr.rel (%p19) target = $region8
    $region5: #{tpu_custom_call.1} parent=1 // loop_body
      %s23 = ssub.s32 %s18, 1
      %s24 = ssub.s32 %s18, 2
      %s25 = sadd.s32 %s18, 1
      %s26 = ssub.s32 %s18, %s25
      %p27 = scmp.eq.s32.totalorder %s26, 0
      %s29 = sadd.s32 %s28, 1
      %s30 = scalar_select %p27, %s28, %s29
      %p33 = pneg %p27
      %p34 = scmp.eq.s32.totalorder %s18, 1
      %p35 = por %p33, %p34
      %p36 = scmp.ne.s32.totalorder %s28, %s31
      %p37 = scmp.eq.s32.totalorder %s18, 0
      %p38 = por %p36, %p37
      %p39 = scmp.ne.s32.totalorder %s28, %s31
      %p40 = scmp.eq.s32.totalorder %s23, 1
      %p41 = por %p39, %p40
      %p42 = scmp.ne.s32.totalorder %s31, %s32
      %p43 = scmp.eq.s32.totalorder %s23, 0
      %p44 = por %p42, %p43
      %p45 = scmp.ne.s32.totalorder %s31, %s32
      %p46 = scmp.eq.s32.totalorder %s24, 1
      %p47 = por %p45, %p46
      %p49 = scmp.ne.s32.totalorder %s32, %s48
      %p50 = scmp.eq.s32.totalorder %s24, 0
      %p51 = por %p49, %p50
      %s53 = sadd.s32 %s52, 1
      %p56 = scmp.eq.s32.totalorder %s18, 1
      %p57 = scmp.ne.s32.totalorder %s52, %s54
      %p58 = scmp.eq.s32.totalorder %s18, 0
      %p59 = por %p57, %p58
      %p60 = scmp.ne.s32.totalorder %s52, %s54
      %p61 = scmp.eq.s32.totalorder %s23, 1
      %p62 = por %p60, %p61
      %p63 = scmp.ne.s32.totalorder %s54, %s55
      %p64 = scmp.eq.s32.totalorder %s23, 0
      %p65 = por %p63, %p64
      %p66 = scmp.ne.s32.totalorder %s54, %s55
      %p67 = scmp.eq.s32.totalorder %s24, 1
      %p68 = por %p66, %p67
      %p70 = scmp.ne.s32.totalorder %s55, %s69
      %p71 = scmp.eq.s32.totalorder %s24, 0
      %p72 = por %p70, %p71
      %s74 = sadd.s32 %s73, 1
      %p77 = scmp.eq.s32.totalorder %s18, 1
      %p78 = scmp.ne.s32.totalorder %s73, %s75
      %p79 = scmp.eq.s32.totalorder %s18, 0
      %p80 = por %p78, %p79
      %p81 = scmp.ne.s32.totalorder %s73, %s75
      %p82 = scmp.eq.s32.totalorder %s23, 1
      %p83 = por %p81, %p82
      %p84 = scmp.ne.s32.totalorder %s75, %s76
      %p85 = scmp.eq.s32.totalorder %s23, 0
      %p86 = por %p84, %p85
      %p87 = scmp.ne.s32.totalorder %s75, %s76
      %p88 = scmp.eq.s32.totalorder %s24, 1
      %p89 = por %p87, %p88
      %p91 = scmp.ne.s32.totalorder %s76, %s90
      %p92 = scmp.eq.s32.totalorder %s24, 0
      %p93 = por %p91, %p92
      %s95 = sadd.s32 %s94, 1
      %p98 = scmp.eq.s32.totalorder %s18, 1
      %p99 = scmp.ne.s32.totalorder %s94, %s96
      %p100 = scmp.eq.s32.totalorder %s18, 0
      %p101 = por %p99, %p100
      %p102 = scmp.ne.s32.totalorder %s94, %s96
      %p103 = scmp.eq.s32.totalorder %s23, 1
      %p104 = por %p102, %p103
      %p105 = scmp.ne.s32.totalorder %s96, %s97
      %p106 = scmp.eq.s32.totalorder %s23, 0
      %p107 = por %p105, %p106
      %p108 = scmp.ne.s32.totalorder %s96, %s97
      %p109 = scmp.eq.s32.totalorder %s24, 1
      %p110 = por %p108, %p109
      %p112 = scmp.ne.s32.totalorder %s97, %s111
      %p113 = scmp.eq.s32.totalorder %s24, 0
      %p114 = por %p112, %p113
      %s116 = sadd.s32 %s115, 1
      %p119 = scmp.eq.s32.totalorder %s18, 1
      %p120 = scmp.ne.s32.totalorder %s115, %s117
      %p121 = scmp.eq.s32.totalorder %s18, 0
      %p122 = por %p120, %p121
      %p123 = scmp.ne.s32.totalorder %s115, %s117
      %p124 = scmp.eq.s32.totalorder %s23, 1
      %p125 = por %p123, %p124
      %p126 = scmp.ne.s32.totalorder %s117, %s118
      %p127 = scmp.eq.s32.totalorder %s23, 0
      %p128 = por %p126, %p127
      %p129 = scmp.ne.s32.totalorder %s117, %s118
      %p130 = scmp.eq.s32.totalorder %s24, 1
      %p131 = por %p129, %p130
      %p133 = scmp.ne.s32.totalorder %s118, %s132
      %p134 = scmp.eq.s32.totalorder %s24, 0
      %p135 = por %p133, %p134
      %s136 = ssub.s32 %s18, %s25
      %p137 = scmp.eq.s32.totalorder %s136, 0
      %s139 = sadd.s32 %s138, 1
      %s140 = scalar_select %p137, %s138, %s139
      %p143 = pneg %p137
      %p144 = scmp.eq.s32.totalorder %s18, 1
      %p145 = por %p143, %p144
      %p146 = scmp.ne.s32.totalorder %s138, %s141
      %p147 = scmp.eq.s32.totalorder %s18, 0
      %p148 = por %p146, %p147
      %p149 = scmp.ne.s32.totalorder %s138, %s141
      %p150 = scmp.eq.s32.totalorder %s23, 1
      %p151 = por %p149, %p150
      %p152 = scmp.ne.s32.totalorder %s141, %s142
      %p153 = scmp.eq.s32.totalorder %s23, 0
      %p154 = por %p152, %p153
      %p155 = scmp.ne.s32.totalorder %s141, %s142
      %p156 = scmp.eq.s32.totalorder %s24, 1
      %p157 = por %p155, %p156
      %p159 = scmp.ne.s32.totalorder %s142, %s158
      %p160 = scmp.eq.s32.totalorder %s24, 0
      %p161 = por %p159, %p160
      %p162 = scmp.le.s32.totalorder 1, %s18
      %p163 = scmp.lt.s32.totalorder %s18, 3
      %p164 = pnand %p162, %p163
      %p165 = pneg %p164
      // Predicated region
      $region9: #{tpu_custom_call.1} parent=5 // pred_check
        _
      $region10: #{tpu_custom_call.1} parent=5 // pred_check_branch
        %167 = sbr.rel (%p164) target = $region12
      $region11: #{tpu_custom_call.1} parent=5 // pred_region
        %s168 = ssub.s32 %s18, 1
        // Predicated region
        $region13: #{tpu_custom_call.1} parent=11 // pred_check
          %p169 = pneg %p65
        $region14: #{tpu_custom_call.1} parent=11 // pred_check_branch
          %171 = sbr.rel (%p169) target = $region16
        $region15: #{tpu_custom_call.1} parent=11 // pred_region
          %s173 = ssub.s32 18432, 18432
          %174 = vsyncadd [#allocation6], %s173
          %s175 = sshll.u32 [#allocation5], 4
          %s176 = int_to_ptr.vmem [resolvable:$true] %s175
          %181 = dma.hbm_to_vmem [thread:$0]  %s1, 18432, %s176, [#allocation6], 64, 64, 4
        $region16: #{tpu_custom_call.1} parent=11 // pred_fallthru
          _
        // Predicated region
        $region17: #{tpu_custom_call.1} parent=11 // pred_check
          %p182 = pneg %p86
        $region18: #{tpu_custom_call.1} parent=11 // pred_check_branch
          %184 = sbr.rel (%p182) target = $region20
        $region19: #{tpu_custom_call.1} parent=11 // pred_region
          _
        $region20: #{tpu_custom_call.1} parent=11 // pred_fallthru
          _
        // Predicated region
        $region21: #{tpu_custom_call.1} parent=11 // pred_check
          %p185 = pneg %p107
        $region22: #{tpu_custom_call.1} parent=11 // pred_check_branch
          %187 = sbr.rel (%p185) target = $region24
        $region23: #{tpu_custom_call.1} parent=11 // pred_region
          %s189 = ssub.s32 9216, 9216
          %190 = vsyncadd [#allocation6], %s189
          %s191 = sshll.u32 [#allocation7], 4
          %s192 = int_to_ptr.vmem [resolvable:$true] %s191
          %197 = dma.hbm_to_vmem [thread:$0]  %s3, 9216, %s192, [#allocation6], 64, 64, 4
        $region24: #{tpu_custom_call.1} parent=11 // pred_fallthru
          _
        // Predicated region
        $region25: #{tpu_custom_call.1} parent=11 // pred_check
          %p198 = pneg %p128
        $region26: #{tpu_custom_call.1} parent=11 // pred_check_branch
          %200 = sbr.rel (%p198) target = $region28
        $region27: #{tpu_custom_call.1} parent=11 // pred_region
          _
        $region28: #{tpu_custom_call.1} parent=11 // pred_fallthru
          _
      $region12: #{tpu_custom_call.1} parent=5 // pred_fallthru
        _
      %p201 = scmp.lt.s32.totalorder %s18, 2
      // Predicated region
      $region29: #{tpu_custom_call.1} parent=5 // pred_check
        %p202 = pneg %p201
      $region30: #{tpu_custom_call.1} parent=5 // pred_check_branch
        %204 = sbr.rel (%p202) target = $region32
      $region31: #{tpu_custom_call.1} parent=5 // pred_region
        // Predicated region
        $region33: #{tpu_custom_call.1} parent=31 // pred_check
          %p205 = pneg %p38
        $region34: #{tpu_custom_call.1} parent=31 // pred_check_branch
          %207 = sbr.rel (%p205) target = $region36
        $region35: #{tpu_custom_call.1} parent=31 // pred_region
          %s208 = sand.u32 %s28, 1
          %s209 = scalar_lea.sflag [#allocation3], %s208
          %s210 = sand.u32 %s28, 1
          %s211 = smul.addr %s210, 8
          %s212 = scalar_lea.vmem [#allocation2], %s211
          %s214 = ssub.s32 128, 128
          %215 = vsyncadd %s209, %s214
          %s216 = smul.addr %s18, 2
          %s217 = smul.addr %s216, 64
          %s218 = scalar_lea.hbm %s0, %s217
          %s220 = sshll.u32 %s212, 4
          %s221 = int_to_ptr.vmem [resolvable:$true] %s220
          %223 = dma.hbm_to_vmem [thread:$0]  %s218, 128, %s221, %s209
        $region36: #{tpu_custom_call.1} parent=31 // pred_fallthru
          _
      $region32: #{tpu_custom_call.1} parent=5 // pred_fallthru
        _
      %p224 = scmp.le.s32.totalorder 1, %s18
      %p225 = scmp.lt.s32.totalorder %s18, 3
      %p226 = pnand %p224, %p225
      %p227 = pneg %p226
      // Predicated region
      $region37: #{tpu_custom_call.1} parent=5 // pred_check
        _
      $region38: #{tpu_custom_call.1} parent=5 // pred_check_branch
        %229 = sbr.rel (%p226) target = $region40
      $region39: #{tpu_custom_call.1} parent=5 // pred_region
        %s230 = ssub.s32 %s18, 1
        %s231 = sand.u32 %s31, 1
        %s232 = scalar_lea.sflag [#allocation3], %s231
        %s233 = sand.u32 %s31, 1
        %s234 = smul.addr %s233, 8
        %s235 = scalar_lea.vmem [#allocation2], %s234
        // Predicated region
        $region41: #{tpu_custom_call.1} parent=39 // pred_check
          %p236 = pneg %p44
        $region42: #{tpu_custom_call.1} parent=39 // pred_check_branch
          %238 = sbr.rel (%p236) target = $region44
        $region43: #{tpu_custom_call.1} parent=39 // pred_region
          %239 = dma.done %s232, 128
        $region44: #{tpu_custom_call.1} parent=39 // pred_fallthru
          _
        // Predicated region
        $region45: #{tpu_custom_call.1} parent=39 // pred_check
          %p240 = pneg %p65
        $region46: #{tpu_custom_call.1} parent=39 // pred_check_branch
          %242 = sbr.rel (%p240) target = $region48
        $region47: #{tpu_custom_call.1} parent=39 // pred_region
          %243 = dma.done [#allocation6], 18432
        $region48: #{tpu_custom_call.1} parent=39 // pred_fallthru
          _
        // Predicated region
        $region49: #{tpu_custom_call.1} parent=39 // pred_check
          %p244 = pneg %p107
        $region50: #{tpu_custom_call.1} parent=39 // pred_check_branch
          %246 = sbr.rel (%p244) target = $region52
        $region51: #{tpu_custom_call.1} parent=39 // pred_region
          %247 = dma.done [#allocation6], 9216
        $region52: #{tpu_custom_call.1} parent=39 // pred_fallthru
          _
        %s248 = sand.u32 %s31, 1
        %s249 = scalar_lea.sflag [#allocation3], %s248
        %s250 = sand.u32 %s31, 1
        %s251 = smul.addr %s250, 8
        %s252 = scalar_lea.vmem [#allocation2], %s251
        %p253 = pneg %p44
        %p254 = pneg %p41
        %p255 = pneg %p65
        %p256 = pneg %p62
        %p257 = pneg %p86
        %p258 = pneg %p83
        %p259 = pneg %p107
        %p260 = pneg %p104
        %p261 = pneg %p128
        %p262 = pneg %p125
        %p263 = pneg %p154
        %p264 = pneg %p151
        %s265 = sand.u32 %s141, 1
        %s266 = scalar_lea.sflag [#allocation4], %s265
        %s267 = sand.u32 %s141, 1
        %s268 = smul.addr %s267, 8
        %s269 = scalar_lea.vmem [#allocation8], %s268
        %v271 = vld [vmem:[%s235] sm:$0xff]
        %v272 = vld [vmem:[%s2] sm:$0x1]
        %v273 = vld [vmem:[#allocation5] sm:$0xf]
        %v274 = vld [vmem:[#allocation5 + $0x4] sm:$0xf]
        %v275 = vld [vmem:[#allocation5 + $0x8] sm:$0xf]
        %v276 = vld [vmem:[#allocation5 + $0xc] sm:$0xf]
        %v277 = vld [vmem:[#allocation5 + $0x10] sm:$0xf]
        %v278 = vld [vmem:[#allocation5 + $0x14] sm:$0xf]
        %v279 = vld [vmem:[#allocation5 + $0x18] sm:$0xf]
        %v280 = vld [vmem:[#allocation5 + $0x1c] sm:$0xf]
        %v281 = vld [vmem:[#allocation5 + $0x20] sm:$0xf]
        %v282 = vld [vmem:[#allocation5 + $0x24] sm:$0xf]
        %v283 = vld [vmem:[#allocation5 + $0x28] sm:$0xf]
        %v284 = vld [vmem:[#allocation5 + $0x2c] sm:$0xf]
        %v285 = vld [vmem:[#allocation5 + $0x30] sm:$0xf]
        %v286 = vld [vmem:[#allocation5 + $0x34] sm:$0xf]
        %v287 = vld [vmem:[#allocation5 + $0x38] sm:$0xf]
        %v288 = vld [vmem:[#allocation5 + $0x3c] sm:$0xf]
        %v289 = vld [vmem:[#allocation5 + $0x40] sm:$0xf]
        %v290 = vld [vmem:[#allocation5 + $0x44] sm:$0xf]
        %v291 = vld [vmem:[#allocation5 + $0x48] sm:$0xf]
        %v292 = vld [vmem:[#allocation5 + $0x4c] sm:$0xf]
        %v293 = vld [vmem:[#allocation5 + $0x50] sm:$0xf]
        %v294 = vld [vmem:[#allocation5 + $0x54] sm:$0xf]
        %v295 = vld [vmem:[#allocation5 + $0x58] sm:$0xf]
        %v296 = vld [vmem:[#allocation5 + $0x5c] sm:$0xf]
        %v297 = vld [vmem:[#allocation5 + $0x60] sm:$0xf]
        %v298 = vld [vmem:[#allocation5 + $0x64] sm:$0xf]
        %v299 = vld [vmem:[#allocation5 + $0x68] sm:$0xf]
        %v300 = vld [vmem:[#allocation5 + $0x6c] sm:$0xf]
        %v301 = vld [vmem:[#allocation5 + $0x70] sm:$0xf]
        %v302 = vld [vmem:[#allocation5 + $0x74] sm:$0xf]
        %v303 = vld [vmem:[#allocation5 + $0x78] sm:$0xf]
        %v304 = vld [vmem:[#allocation5 + $0x7c] sm:$0xf]
        %v306 = vlaneseq
        %v307 = vshrl.u32 %v306, 7
        %v308 = vsub.s32 0, %v307
        %v309 = vrot.slane %v272, %v308
        %v312 = vunpack.c.l.b16 %v271
        %v313 = vunpack.c.h.b16 %v271
        %v314 = vpack.c.b16 %v312, %v312
        %v315 = vpack.c.b16 %v313, %v313
        %v350 = vunpack.c.l.b16 %v273
        %v351 = vunpack.c.l.b16 %v274
        %v352 = vunpack.c.l.b16 %v275
        %v353 = vunpack.c.l.b16 %v276
        %v354 = vunpack.c.l.b16 %v277
        %v355 = vunpack.c.l.b16 %v278
        %v356 = vunpack.c.l.b16 %v279
        %v357 = vunpack.c.l.b16 %v280
        %v358 = vunpack.c.l.b16 %v281
        %v359 = vunpack.c.l.b16 %v282
        %v360 = vunpack.c.l.b16 %v283
        %v361 = vunpack.c.l.b16 %v284
        %v362 = vunpack.c.l.b16 %v285
        %v363 = vunpack.c.l.b16 %v286
        %v364 = vunpack.c.l.b16 %v287
        %v365 = vunpack.c.l.b16 %v288
        %v366 = vunpack.c.l.b16 %v289
        %v367 = vunpack.c.l.b16 %v290
        %v368 = vunpack.c.l.b16 %v291
        %v369 = vunpack.c.l.b16 %v292
        %v370 = vunpack.c.l.b16 %v293
        %v371 = vunpack.c.l.b16 %v294
        %v372 = vunpack.c.l.b16 %v295
        %v373 = vunpack.c.l.b16 %v296
        %v374 = vunpack.c.l.b16 %v297
        %v375 = vunpack.c.l.b16 %v298
        %v376 = vunpack.c.l.b16 %v299
        %v377 = vunpack.c.l.b16 %v300
        %v378 = vunpack.c.l.b16 %v301
        %v379 = vunpack.c.l.b16 %v302
        %v380 = vunpack.c.l.b16 %v303
        %v381 = vunpack.c.l.b16 %v304
        %v382 = vpack.c.b16 %v351, %v350
        %v383 = vpack.c.b16 %v353, %v352
        %v384 = vpack.c.b16 %v355, %v354
        %v385 = vpack.c.b16 %v357, %v356
        %v386 = vpack.c.b16 %v359, %v358
        %v387 = vpack.c.b16 %v361, %v360
        %v388 = vpack.c.b16 %v363, %v362
        %v389 = vpack.c.b16 %v365, %v364
        %v390 = vpack.c.b16 %v367, %v366
        %v391 = vpack.c.b16 %v369, %v368
        %v392 = vpack.c.b16 %v371, %v370
        %v393 = vpack.c.b16 %v373, %v372
        %v394 = vpack.c.b16 %v375, %v374
        %v395 = vpack.c.b16 %v377, %v376
        %v396 = vpack.c.b16 %v379, %v378
        %v397 = vpack.c.b16 %v381, %v380
        %414 = vmatprep.subr.bf16.mxu0 0
        %415 = vmatpush1.bf16.msra.mxu0 %v389
        %416 = vmatprep.subr.bf16.mxu0 0
        %417 = vmatpush1.bf16.msra.mxu0 %v388
        %418 = vmatprep.subr.bf16.mxu0 0
        %419 = vmatpush1.bf16.msra.mxu0 %v387
        %420 = vmatprep.subr.bf16.mxu0 0
        %421 = vmatpush1.bf16.msra.mxu0 %v386
        %422 = vmatprep.subr.bf16.mxu0 0
        %423 = vmatpush1.bf16.msra.mxu0 %v385
        %424 = vmatprep.subr.bf16.mxu0 0
        %425 = vmatpush1.bf16.msra.mxu0 %v384
        %426 = vmatprep.subr.bf16.mxu0 0
        %427 = vmatpush1.bf16.msra.mxu0 %v383
        %428 = vmatprep.subr.bf16.mxu0 0
        %429 = vmatpush1.bf16.msra.mxu0 %v382
        %430 = vmatprep.subr.bf16.mxu0 0
        %431 = vmatpush2.bf16.msra.mxu0 %v397
        %432 = vmatprep.subr.bf16.mxu0 0
        %433 = vmatpush2.bf16.msra.mxu0 %v396
        %434 = vmatprep.subr.bf16.mxu0 0
        %435 = vmatpush2.bf16.msra.mxu0 %v395
        %436 = vmatprep.subr.bf16.mxu0 0
        %437 = vmatpush2.bf16.msra.mxu0 %v394
        %438 = vmatprep.subr.bf16.mxu0 0
        %439 = vmatpush2.bf16.msra.mxu0 %v393
        %440 = vmatprep.subr.bf16.mxu0 0
        %441 = vmatpush2.bf16.msra.mxu0 %v392
        %442 = vmatprep.subr.bf16.mxu0 0
        %443 = vmatpush2.bf16.msra.mxu0 %v391
        %444 = vmatprep.subr.bf16.mxu0 0
        %445 = vmatpush2.bf16.msra.mxu0 %v390
        %446 = vmatprep.mubr.bf16.mxu0 %v315
        %447 = vmatmul.mubr.bf16.gmra.mxu0 %v314
        %v448 = vpop.f32.mrf.mxu0
        %v449 = vadd.f32 %v309, %v448
        %v450 = vpop.f32.mrf.mxu0
        %v451 = vpop.f32.mrf.mxu0
        %v452 = vpop.f32.mrf.mxu0
        %453 = vdwg.mxu0
        %v454 = vmax.f32 %v449, 0.0
        %v455 = vpack.c.bf16 %v454, %v454
        %v456 = vld [vmem:[#allocation7] sm:$0xf]
        %v457 = vld [vmem:[#allocation7 + $0x4] sm:$0xf]
        %v458 = vld [vmem:[#allocation7 + $0x8] sm:$0xf]
        %v459 = vld [vmem:[#allocation7 + $0xc] sm:$0xf]
        %v460 = vld [vmem:[#allocation7 + $0x10] sm:$0xf]
        %v461 = vld [vmem:[#allocation7 + $0x14] sm:$0xf]
        %v462 = vld [vmem:[#allocation7 + $0x18] sm:$0xf]
        %v463 = vld [vmem:[#allocation7 + $0x1c] sm:$0xf]
        %v464 = vld [vmem:[#allocation7 + $0x20] sm:$0xf]
        %v465 = vld [vmem:[#allocation7 + $0x24] sm:$0xf]
        %v466 = vld [vmem:[#allocation7 + $0x28] sm:$0xf]
        %v467 = vld [vmem:[#allocation7 + $0x2c] sm:$0xf]
        %v468 = vld [vmem:[#allocation7 + $0x30] sm:$0xf]
        %v469 = vld [vmem:[#allocation7 + $0x34] sm:$0xf]
        %v470 = vld [vmem:[#allocation7 + $0x38] sm:$0xf]
        %v471 = vld [vmem:[#allocation7 + $0x3c] sm:$0xf]
        %s472 = scalar_lea.vmem [#allocation5], 128
        %v473 = vld [vmem:[%s472] sm:$0xf]
        %v474 = vld [vmem:[%s472 + $0x4] sm:$0xf]
        %v475 = vld [vmem:[%s472 + $0x8] sm:$0xf]
        %v476 = vld [vmem:[%s472 + $0xc] sm:$0xf]
        %v477 = vld [vmem:[%s472 + $0x10] sm:$0xf]
        %v478 = vld [vmem:[%s472 + $0x14] sm:$0xf]
        %v479 = vld [vmem:[%s472 + $0x18] sm:$0xf]
        %v480 = vld [vmem:[%s472 + $0x1c] sm:$0xf]
        %v481 = vld [vmem:[%s472 + $0x20] sm:$0xf]
        %v482 = vld [vmem:[%s472 + $0x24] sm:$0xf]
        %v483 = vld [vmem:[%s472 + $0x28] sm:$0xf]
        %v484 = vld [vmem:[%s472 + $0x2c] sm:$0xf]
        %v485 = vld [vmem:[%s472 + $0x30] sm:$0xf]
        %v486 = vld [vmem:[%s472 + $0x34] sm:$0xf]
        %v487 = vld [vmem:[%s472 + $0x38] sm:$0xf]
        %v488 = vld [vmem:[%s472 + $0x3c] sm:$0xf]
        %v489 = vld [vmem:[%s472 + $0x40] sm:$0xf]
        %v490 = vld [vmem:[%s472 + $0x44] sm:$0xf]
        %v491 = vld [vmem:[%s472 + $0x48] sm:$0xf]
        %v492 = vld [vmem:[%s472 + $0x4c] sm:$0xf]
        %v493 = vld [vmem:[%s472 + $0x50] sm:$0xf]
        %v494 = vld [vmem:[%s472 + $0x54] sm:$0xf]
        %v495 = vld [vmem:[%s472 + $0x58] sm:$0xf]
        %v496 = vld [vmem:[%s472 + $0x5c] sm:$0xf]
        %v497 = vld [vmem:[%s472 + $0x60] sm:$0xf]
        %v498 = vld [vmem:[%s472 + $0x64] sm:$0xf]
        %v499 = vld [vmem:[%s472 + $0x68] sm:$0xf]
        %v500 = vld [vmem:[%s472 + $0x6c] sm:$0xf]
        %v501 = vld [vmem:[%s472 + $0x70] sm:$0xf]
        %v502 = vld [vmem:[%s472 + $0x74] sm:$0xf]
        %v503 = vld [vmem:[%s472 + $0x78] sm:$0xf]
        %v504 = vld [vmem:[%s472 + $0x7c] sm:$0xf]
        %v537 = vunpack.c.l.b16 %v473
        %v538 = vunpack.c.l.b16 %v474
        %v539 = vunpack.c.l.b16 %v475
        %v540 = vunpack.c.l.b16 %v476
        %v541 = vunpack.c.l.b16 %v477
        %v542 = vunpack.c.l.b16 %v478
        %v543 = vunpack.c.l.b16 %v479
        %v544 = vunpack.c.l.b16 %v480
        %v545 = vunpack.c.l.b16 %v481
        %v546 = vunpack.c.l.b16 %v482
        %v547 = vunpack.c.l.b16 %v483
        %v548 = vunpack.c.l.b16 %v484
        %v549 = vunpack.c.l.b16 %v485
        %v550 = vunpack.c.l.b16 %v486
        %v551 = vunpack.c.l.b16 %v487
        %v552 = vunpack.c.l.b16 %v488
        %v553 = vunpack.c.l.b16 %v489
        %v554 = vunpack.c.l.b16 %v490
        %v555 = vunpack.c.l.b16 %v491
        %v556 = vunpack.c.l.b16 %v492
        %v557 = vunpack.c.l.b16 %v493
        %v558 = vunpack.c.l.b16 %v494
        %v559 = vunpack.c.l.b16 %v495
        %v560 = vunpack.c.l.b16 %v496
        %v561 = vunpack.c.l.b16 %v497
        %v562 = vunpack.c.l.b16 %v498
        %v563 = vunpack.c.l.b16 %v499
        %v564 = vunpack.c.l.b16 %v500
        %v565 = vunpack.c.l.b16 %v501
        %v566 = vunpack.c.l.b16 %v502
        %v567 = vunpack.c.l.b16 %v503
        %v568 = vunpack.c.l.b16 %v504
        %v569 = vpack.c.b16 %v538, %v537
        %v570 = vpack.c.b16 %v540, %v539
        %v571 = vpack.c.b16 %v542, %v541
        %v572 = vpack.c.b16 %v544, %v543
        %v573 = vpack.c.b16 %v546, %v545
        %v574 = vpack.c.b16 %v548, %v547
        %v575 = vpack.c.b16 %v550, %v549
        %v576 = vpack.c.b16 %v552, %v551
        %v577 = vpack.c.b16 %v554, %v553
        %v578 = vpack.c.b16 %v556, %v555
        %v579 = vpack.c.b16 %v558, %v557
        %v580 = vpack.c.b16 %v560, %v559
        %v581 = vpack.c.b16 %v562, %v561
        %v582 = vpack.c.b16 %v564, %v563
        %v583 = vpack.c.b16 %v566, %v565
        %v584 = vpack.c.b16 %v568, %v567
        %601 = vmatprep.subr.bf16.mxu0 0
        %602 = vmatpush1.bf16.msra.mxu0 %v576
        %603 = vmatprep.subr.bf16.mxu0 0
        %604 = vmatpush1.bf16.msra.mxu0 %v575
        %605 = vmatprep.subr.bf16.mxu0 0
        %606 = vmatpush1.bf16.msra.mxu0 %v574
        %607 = vmatprep.subr.bf16.mxu0 0
        %608 = vmatpush1.bf16.msra.mxu0 %v573
        %609 = vmatprep.subr.bf16.mxu0 0
        %610 = vmatpush1.bf16.msra.mxu0 %v572
        %611 = vmatprep.subr.bf16.mxu0 0
        %612 = vmatpush1.bf16.msra.mxu0 %v571
        %613 = vmatprep.subr.bf16.mxu0 0
        %614 = vmatpush1.bf16.msra.mxu0 %v570
        %615 = vmatprep.subr.bf16.mxu0 0
        %616 = vmatpush1.bf16.msra.mxu0 %v569
        %617 = vmatprep.subr.bf16.mxu0 0
        %618 = vmatpush2.bf16.msra.mxu0 %v584
        %619 = vmatprep.subr.bf16.mxu0 0
        %620 = vmatpush2.bf16.msra.mxu0 %v583
        %621 = vmatprep.subr.bf16.mxu0 0
        %622 = vmatpush2.bf16.msra.mxu0 %v582
        %623 = vmatprep.subr.bf16.mxu0 0
        %624 = vmatpush2.bf16.msra.mxu0 %v581
        %625 = vmatprep.subr.bf16.mxu0 0
        %626 = vmatpush2.bf16.msra.mxu0 %v580
        %627 = vmatprep.subr.bf16.mxu0 0
        %628 = vmatpush2.bf16.msra.mxu0 %v579
        %629 = vmatprep.subr.bf16.mxu0 0
        %630 = vmatpush2.bf16.msra.mxu0 %v578
        %631 = vmatprep.subr.bf16.mxu0 0
        %632 = vmatpush2.bf16.msra.mxu0 %v577
        %633 = vmatprep.mubr.bf16.mxu0 %v315
        %634 = vmatmul.mubr.bf16.gmra.mxu0 %v314
        %v635 = vpop.f32.mrf.mxu0
        %v636 = vadd.f32 %v309, %v635
        %v637 = vpop.f32.mrf.mxu0
        %v638 = vpop.f32.mrf.mxu0
        %v639 = vpop.f32.mrf.mxu0
        %640 = vdwg.mxu0
        %v641 = vmax.f32 %v636, 0.0
        %v642 = vpack.c.bf16 %v641, %v641
        %s643 = scalar_lea.vmem [#allocation7], 64
        %v644 = vld [vmem:[%s643] sm:$0xf]
        %v645 = vld [vmem:[%s643 + $0x4] sm:$0xf]
        %v646 = vld [vmem:[%s643 + $0x8] sm:$0xf]
        %v647 = vld [vmem:[%s643 + $0xc] sm:$0xf]
        %v648 = vld [vmem:[%s643 + $0x10] sm:$0xf]
        %v649 = vld [vmem:[%s643 + $0x14] sm:$0xf]
        %v650 = vld [vmem:[%s643 + $0x18] sm:$0xf]
        %v651 = vld [vmem:[%s643 + $0x1c] sm:$0xf]
        %v652 = vld [vmem:[%s643 + $0x20] sm:$0xf]
        %v653 = vld [vmem:[%s643 + $0x24] sm:$0xf]
        %v654 = vld [vmem:[%s643 + $0x28] sm:$0xf]
        %v655 = vld [vmem:[%s643 + $0x2c] sm:$0xf]
        %v656 = vld [vmem:[%s643 + $0x30] sm:$0xf]
        %v657 = vld [vmem:[%s643 + $0x34] sm:$0xf]
        %v658 = vld [vmem:[%s643 + $0x38] sm:$0xf]
        %v659 = vld [vmem:[%s643 + $0x3c] sm:$0xf]
        %v676 = vunpack.c.l.b16 %v644
        %v677 = vunpack.c.l.b16 %v645
        %v678 = vunpack.c.l.b16 %v646
        %v679 = vunpack.c.l.b16 %v647
        %v680 = vunpack.c.l.b16 %v648
        %v681 = vunpack.c.l.b16 %v649
        %v682 = vunpack.c.l.b16 %v650
        %v683 = vunpack.c.l.b16 %v651
        %v684 = vunpack.c.l.b16 %v652
        %v685 = vunpack.c.l.b16 %v653
        %v686 = vunpack.c.l.b16 %v654
        %v687 = vunpack.c.l.b16 %v655
        %v688 = vunpack.c.l.b16 %v656
        %v689 = vunpack.c.l.b16 %v657
        %v690 = vunpack.c.l.b16 %v658
        %v691 = vunpack.c.l.b16 %v659
        %v692 = vpack.c.b16 %v677, %v676
        %v693 = vpack.c.b16 %v679, %v678
        %v694 = vpack.c.b16 %v681, %v680
        %v695 = vpack.c.b16 %v683, %v682
        %v696 = vpack.c.b16 %v685, %v684
        %v697 = vpack.c.b16 %v687, %v686
        %v698 = vpack.c.b16 %v689, %v688
        %v699 = vpack.c.b16 %v691, %v690
        %708 = vmatprep.subr.bf16.mxu0 0
        %709 = vmatpush1.bf16.msra.mxu0 %v699
        %710 = vmatprep.subr.bf16.mxu0 0
        %711 = vmatpush1.bf16.msra.mxu0 %v698
        %712 = vmatprep.subr.bf16.mxu0 0
        %713 = vmatpush1.bf16.msra.mxu0 %v697
        %714 = vmatprep.subr.bf16.mxu0 0
        %715 = vmatpush1.bf16.msra.mxu0 %v696
        %716 = vmatprep.subr.bf16.mxu0 0
        %717 = vmatpush1.bf16.msra.mxu0 %v695
        %718 = vmatprep.subr.bf16.mxu0 0
        %719 = vmatpush1.bf16.msra.mxu0 %v694
        %720 = vmatprep.subr.bf16.mxu0 0
        %721 = vmatpush1.bf16.msra.mxu0 %v693
        %722 = vmatprep.subr.bf16.mxu0 0
        %723 = vmatpush1.bf16.msra.mxu0 %v692
        %724 = vmatprep.subr.bf16.mxu0 0
        %725 = vmatpush2.bf16.msra.mxu0 0
        %726 = vmatprep.subr.bf16.mxu0 0
        %727 = vmatpush2.bf16.msra.mxu0 0
        %728 = vmatprep.subr.bf16.mxu0 0
        %729 = vmatpush2.bf16.msra.mxu0 0
        %730 = vmatprep.subr.bf16.mxu0 0
        %731 = vmatpush2.bf16.msra.mxu0 0
        %732 = vmatprep.subr.bf16.mxu0 0
        %733 = vmatpush2.bf16.msra.mxu0 0
        %734 = vmatprep.subr.bf16.mxu0 0
        %735 = vmatpush2.bf16.msra.mxu0 0
        %736 = vmatprep.subr.bf16.mxu0 0
        %737 = vmatpush2.bf16.msra.mxu0 0
        %738 = vmatprep.subr.bf16.mxu0 0
        %739 = vmatpush2.bf16.msra.mxu0 0
        %740 = vmatprep.mubr.bf16.mxu0 0
        %741 = vmatmul.mubr.bf16.gmra.mxu0 %v642
        %v742 = vpop.f32.mrf.mxu0
        %v743 = vadd.f32 0.0, %v742
        %v744 = vpop.f32.mrf.mxu0
        %v745 = vpop.f32.mrf.mxu0
        %v746 = vpop.f32.mrf.mxu0
        %747 = vdwg.mxu0
        %v764 = vunpack.c.l.b16 %v456
        %v765 = vunpack.c.l.b16 %v457
        %v766 = vunpack.c.l.b16 %v458
        %v767 = vunpack.c.l.b16 %v459
        %v768 = vunpack.c.l.b16 %v460
        %v769 = vunpack.c.l.b16 %v461
        %v770 = vunpack.c.l.b16 %v462
        %v771 = vunpack.c.l.b16 %v463
        %v772 = vunpack.c.l.b16 %v464
        %v773 = vunpack.c.l.b16 %v465
        %v774 = vunpack.c.l.b16 %v466
        %v775 = vunpack.c.l.b16 %v467
        %v776 = vunpack.c.l.b16 %v468
        %v777 = vunpack.c.l.b16 %v469
        %v778 = vunpack.c.l.b16 %v470
        %v779 = vunpack.c.l.b16 %v471
        %v780 = vpack.c.b16 %v765, %v764
        %v781 = vpack.c.b16 %v767, %v766
        %v782 = vpack.c.b16 %v769, %v768
        %v783 = vpack.c.b16 %v771, %v770
        %v784 = vpack.c.b16 %v773, %v772
        %v785 = vpack.c.b16 %v775, %v774
        %v786 = vpack.c.b16 %v777, %v776
        %v787 = vpack.c.b16 %v779, %v778
        %796 = vmatprep.subr.bf16.mxu0 0
        %797 = vmatpush1.bf16.msra.mxu0 %v787
        %798 = vmatprep.subr.bf16.mxu0 0
        %799 = vmatpush1.bf16.msra.mxu0 %v786
        %800 = vmatprep.subr.bf16.mxu0 0
        %801 = vmatpush1.bf16.msra.mxu0 %v785
        %802 = vmatprep.subr.bf16.mxu0 0
        %803 = vmatpush1.bf16.msra.mxu0 %v784
        %804 = vmatprep.subr.bf16.mxu0 0
        %805 = vmatpush1.bf16.msra.mxu0 %v783
        %806 = vmatprep.subr.bf16.mxu0 0
        %807 = vmatpush1.bf16.msra.mxu0 %v782
        %808 = vmatprep.subr.bf16.mxu0 0
        %809 = vmatpush1.bf16.msra.mxu0 %v781
        %810 = vmatprep.subr.bf16.mxu0 0
        %811 = vmatpush1.bf16.msra.mxu0 %v780
        %812 = vmatprep.subr.bf16.mxu0 0
        %813 = vmatpush2.bf16.msra.mxu0 0
        %814 = vmatprep.subr.bf16.mxu0 0
        %815 = vmatpush2.bf16.msra.mxu0 0
        %816 = vmatprep.subr.bf16.mxu0 0
        %817 = vmatpush2.bf16.msra.mxu0 0
        %818 = vmatprep.subr.bf16.mxu0 0
        %819 = vmatpush2.bf16.msra.mxu0 0
        %820 = vmatprep.subr.bf16.mxu0 0
        %821 = vmatpush2.bf16.msra.mxu0 0
        %822 = vmatprep.subr.bf16.mxu0 0
        %823 = vmatpush2.bf16.msra.mxu0 0
        %824 = vmatprep.subr.bf16.mxu0 0
        %825 = vmatpush2.bf16.msra.mxu0 0
        %826 = vmatprep.subr.bf16.mxu0 0
        %827 = vmatpush2.bf16.msra.mxu0 0
        %828 = vmatprep.mubr.bf16.mxu0 0
        %829 = vmatmul.mubr.bf16.gmra.mxu0 %v455
        %v830 = vpop.f32.mrf.mxu0
        %v831 = vadd.f32 %v743, %v830
        %v832 = vpop.f32.mrf.mxu0
        %v833 = vpop.f32.mrf.mxu0
        %v834 = vpop.f32.mrf.mxu0
        %835 = vdwg.mxu0
        %s836 = scalar_lea.vmem [#allocation5], 256
        %v837 = vld [vmem:[%s836] sm:$0xf]
        %v838 = vld [vmem:[%s836 + $0x4] sm:$0xf]
        %v839 = vld [vmem:[%s836 + $0x8] sm:$0xf]
        %v840 = vld [vmem:[%s836 + $0xc] sm:$0xf]
        %v841 = vld [vmem:[%s836 + $0x10] sm:$0xf]
        %v842 = vld [vmem:[%s836 + $0x14] sm:$0xf]
        %v843 = vld [vmem:[%s836 + $0x18] sm:$0xf]
        %v844 = vld [vmem:[%s836 + $0x1c] sm:$0xf]
        %v845 = vld [vmem:[%s836 + $0x20] sm:$0xf]
        %v846 = vld [vmem:[%s836 + $0x24] sm:$0xf]
        %v847 = vld [vmem:[%s836 + $0x28] sm:$0xf]
        %v848 = vld [vmem:[%s836 + $0x2c] sm:$0xf]
        %v849 = vld [vmem:[%s836 + $0x30] sm:$0xf]
        %v850 = vld [vmem:[%s836 + $0x34] sm:$0xf]
        %v851 = vld [vmem:[%s836 + $0x38] sm:$0xf]
        %v852 = vld [vmem:[%s836 + $0x3c] sm:$0xf]
        %v853 = vld [vmem:[%s836 + $0x40] sm:$0xf]
        %v854 = vld [vmem:[%s836 + $0x44] sm:$0xf]
        %v855 = vld [vmem:[%s836 + $0x48] sm:$0xf]
        %v856 = vld [vmem:[%s836 + $0x4c] sm:$0xf]
        %v857 = vld [vmem:[%s836 + $0x50] sm:$0xf]
        %v858 = vld [vmem:[%s836 + $0x54] sm:$0xf]
        %v859 = vld [vmem:[%s836 + $0x58] sm:$0xf]
        %v860 = vld [vmem:[%s836 + $0x5c] sm:$0xf]
        %v861 = vld [vmem:[%s836 + $0x60] sm:$0xf]
        %v862 = vld [vmem:[%s836 + $0x64] sm:$0xf]
        %v863 = vld [vmem:[%s836 + $0x68] sm:$0xf]
        %v864 = vld [vmem:[%s836 + $0x6c] sm:$0xf]
        %v865 = vld [vmem:[%s836 + $0x70] sm:$0xf]
        %v866 = vld [vmem:[%s836 + $0x74] sm:$0xf]
        %v867 = vld [vmem:[%s836 + $0x78] sm:$0xf]
        %v868 = vld [vmem:[%s836 + $0x7c] sm:$0xf]
        %v901 = vunpack.c.l.b16 %v837
        %v902 = vunpack.c.l.b16 %v838
        %v903 = vunpack.c.l.b16 %v839
        %v904 = vunpack.c.l.b16 %v840
        %v905 = vunpack.c.l.b16 %v841
        %v906 = vunpack.c.l.b16 %v842
        %v907 = vunpack.c.l.b16 %v843
        %v908 = vunpack.c.l.b16 %v844
        %v909 = vunpack.c.l.b16 %v845
        %v910 = vunpack.c.l.b16 %v846
        %v911 = vunpack.c.l.b16 %v847
        %v912 = vunpack.c.l.b16 %v848
        %v913 = vunpack.c.l.b16 %v849
        %v914 = vunpack.c.l.b16 %v850
        %v915 = vunpack.c.l.b16 %v851
        %v916 = vunpack.c.l.b16 %v852
        %v917 = vunpack.c.l.b16 %v853
        %v918 = vunpack.c.l.b16 %v854
        %v919 = vunpack.c.l.b16 %v855
        %v920 = vunpack.c.l.b16 %v856
        %v921 = vunpack.c.l.b16 %v857
        %v922 = vunpack.c.l.b16 %v858
        %v923 = vunpack.c.l.b16 %v859
        %v924 = vunpack.c.l.b16 %v860
        %v925 = vunpack.c.l.b16 %v861
        %v926 = vunpack.c.l.b16 %v862
        %v927 = vunpack.c.l.b16 %v863
        %v928 = vunpack.c.l.b16 %v864
        %v929 = vunpack.c.l.b16 %v865
        %v930 = vunpack.c.l.b16 %v866
        %v931 = vunpack.c.l.b16 %v867
        %v932 = vunpack.c.l.b16 %v868
        %v933 = vpack.c.b16 %v902, %v901
        %v934 = vpack.c.b16 %v904, %v903
        %v935 = vpack.c.b16 %v906, %v905
        %v936 = vpack.c.b16 %v908, %v907
        %v937 = vpack.c.b16 %v910, %v909
        %v938 = vpack.c.b16 %v912, %v911
        %v939 = vpack.c.b16 %v914, %v913
        %v940 = vpack.c.b16 %v916, %v915
        %v941 = vpack.c.b16 %v918, %v917
        %v942 = vpack.c.b16 %v920, %v919
        %v943 = vpack.c.b16 %v922, %v921
        %v944 = vpack.c.b16 %v924, %v923
        %v945 = vpack.c.b16 %v926, %v925
        %v946 = vpack.c.b16 %v928, %v927
        %v947 = vpack.c.b16 %v930, %v929
        %v948 = vpack.c.b16 %v932, %v931
        %965 = vmatprep.subr.bf16.mxu0 0
        %966 = vmatpush1.bf16.msra.mxu0 %v940
        %967 = vmatprep.subr.bf16.mxu0 0
        %968 = vmatpush1.bf16.msra.mxu0 %v939
        %969 = vmatprep.subr.bf16.mxu0 0
        %970 = vmatpush1.bf16.msra.mxu0 %v938
        %971 = vmatprep.subr.bf16.mxu0 0
        %972 = vmatpush1.bf16.msra.mxu0 %v937
        %973 = vmatprep.subr.bf16.mxu0 0
        %974 = vmatpush1.bf16.msra.mxu0 %v936
        %975 = vmatprep.subr.bf16.mxu0 0
        %976 = vmatpush1.bf16.msra.mxu0 %v935
        %977 = vmatprep.subr.bf16.mxu0 0
        %978 = vmatpush1.bf16.msra.mxu0 %v934
        %979 = vmatprep.subr.bf16.mxu0 0
        %980 = vmatpush1.bf16.msra.mxu0 %v933
        %981 = vmatprep.subr.bf16.mxu0 0
        %982 = vmatpush2.bf16.msra.mxu0 %v948
        %983 = vmatprep.subr.bf16.mxu0 0
        %984 = vmatpush2.bf16.msra.mxu0 %v947
        %985 = vmatprep.subr.bf16.mxu0 0
        %986 = vmatpush2.bf16.msra.mxu0 %v946
        %987 = vmatprep.subr.bf16.mxu0 0
        %988 = vmatpush2.bf16.msra.mxu0 %v945
        %989 = vmatprep.subr.bf16.mxu0 0
        %990 = vmatpush2.bf16.msra.mxu0 %v944
        %991 = vmatprep.subr.bf16.mxu0 0
        %992 = vmatpush2.bf16.msra.mxu0 %v943
        %993 = vmatprep.subr.bf16.mxu0 0
        %994 = vmatpush2.bf16.msra.mxu0 %v942
        %995 = vmatprep.subr.bf16.mxu0 0
        %996 = vmatpush2.bf16.msra.mxu0 %v941
        %997 = vmatprep.mubr.bf16.mxu0 %v315
        %998 = vmatmul.mubr.bf16.gmra.mxu0 %v314
        %v999 = vpop.f32.mrf.mxu0
        %v1000 = vadd.f32 %v309, %v999
        %v1001 = vpop.f32.mrf.mxu0
        %v1002 = vpop.f32.mrf.mxu0
        %v1003 = vpop.f32.mrf.mxu0
        %1004 = vdwg.mxu0
        %v1005 = vmax.f32 %v1000, 0.0
        %v1006 = vpack.c.bf16 %v1005, %v1005
        %s1007 = scalar_lea.vmem [#allocation7], 128
        %v1008 = vld [vmem:[%s1007] sm:$0xf]
        %v1009 = vld [vmem:[%s1007 + $0x4] sm:$0xf]
        %v1010 = vld [vmem:[%s1007 + $0x8] sm:$0xf]
        %v1011 = vld [vmem:[%s1007 + $0xc] sm:$0xf]
        %v1012 = vld [vmem:[%s1007 + $0x10] sm:$0xf]
        %v1013 = vld [vmem:[%s1007 + $0x14] sm:$0xf]
        %v1014 = vld [vmem:[%s1007 + $0x18] sm:$0xf]
        %v1015 = vld [vmem:[%s1007 + $0x1c] sm:$0xf]
        %v1016 = vld [vmem:[%s1007 + $0x20] sm:$0xf]
        %v1017 = vld [vmem:[%s1007 + $0x24] sm:$0xf]
        %v1018 = vld [vmem:[%s1007 + $0x28] sm:$0xf]
        %v1019 = vld [vmem:[%s1007 + $0x2c] sm:$0xf]
        %v1020 = vld [vmem:[%s1007 + $0x30] sm:$0xf]
        %v1021 = vld [vmem:[%s1007 + $0x34] sm:$0xf]
        %v1022 = vld [vmem:[%s1007 + $0x38] sm:$0xf]
        %v1023 = vld [vmem:[%s1007 + $0x3c] sm:$0xf]
        %v1040 = vunpack.c.l.b16 %v1008
        %v1041 = vunpack.c.l.b16 %v1009
        %v1042 = vunpack.c.l.b16 %v1010
        %v1043 = vunpack.c.l.b16 %v1011
        %v1044 = vunpack.c.l.b16 %v1012
        %v1045 = vunpack.c.l.b16 %v1013
        %v1046 = vunpack.c.l.b16 %v1014
        %v1047 = vunpack.c.l.b16 %v1015
        %v1048 = vunpack.c.l.b16 %v1016
        %v1049 = vunpack.c.l.b16 %v1017
        %v1050 = vunpack.c.l.b16 %v1018
        %v1051 = vunpack.c.l.b16 %v1019
        %v1052 = vunpack.c.l.b16 %v1020
        %v1053 = vunpack.c.l.b16 %v1021
        %v1054 = vunpack.c.l.b16 %v1022
        %v1055 = vunpack.c.l.b16 %v1023
        %v1056 = vpack.c.b16 %v1041, %v1040
        %v1057 = vpack.c.b16 %v1043, %v1042
        %v1058 = vpack.c.b16 %v1045, %v1044
        %v1059 = vpack.c.b16 %v1047, %v1046
        %v1060 = vpack.c.b16 %v1049, %v1048
        %v1061 = vpack.c.b16 %v1051, %v1050
        %v1062 = vpack.c.b16 %v1053, %v1052
        %v1063 = vpack.c.b16 %v1055, %v1054
        %1072 = vmatprep.subr.bf16.mxu0 0
        %1073 = vmatpush1.bf16.msra.mxu0 %v1063
        %1074 = vmatprep.subr.bf16.mxu0 0
        %1075 = vmatpush1.bf16.msra.mxu0 %v1062
        %1076 = vmatprep.subr.bf16.mxu0 0
        %1077 = vmatpush1.bf16.msra.mxu0 %v1061
        %1078 = vmatprep.subr.bf16.mxu0 0
        %1079 = vmatpush1.bf16.msra.mxu0 %v1060
        %1080 = vmatprep.subr.bf16.mxu0 0
        %1081 = vmatpush1.bf16.msra.mxu0 %v1059
        %1082 = vmatprep.subr.bf16.mxu0 0
        %1083 = vmatpush1.bf16.msra.mxu0 %v1058
        %1084 = vmatprep.subr.bf16.mxu0 0
        %1085 = vmatpush1.bf16.msra.mxu0 %v1057
        %1086 = vmatprep.subr.bf16.mxu0 0
        %1087 = vmatpush1.bf16.msra.mxu0 %v1056
        %1088 = vmatprep.subr.bf16.mxu0 0
        %1089 = vmatpush2.bf16.msra.mxu0 0
        %1090 = vmatprep.subr.bf16.mxu0 0
        %1091 = vmatpush2.bf16.msra.mxu0 0
        %1092 = vmatprep.subr.bf16.mxu0 0
        %1093 = vmatpush2.bf16.msra.mxu0 0
        %1094 = vmatprep.subr.bf16.mxu0 0
        %1095 = vmatpush2.bf16.msra.mxu0 0
        %1096 = vmatprep.subr.bf16.mxu0 0
        %1097 = vmatpush2.bf16.msra.mxu0 0
        %1098 = vmatprep.subr.bf16.mxu0 0
        %1099 = vmatpush2.bf16.msra.mxu0 0
        %1100 = vmatprep.subr.bf16.mxu0 0
        %1101 = vmatpush2.bf16.msra.mxu0 0
        %1102 = vmatprep.subr.bf16.mxu0 0
        %1103 = vmatpush2.bf16.msra.mxu0 0
        %1104 = vmatprep.mubr.bf16.mxu0 0
        %1105 = vmatmul.mubr.bf16.gmra.mxu0 %v1006
        %v1106 = vpop.f32.mrf.mxu0
        %v1107 = vadd.f32 0.0, %v1106
        %v1108 = vpop.f32.mrf.mxu0
        %v1109 = vpop.f32.mrf.mxu0
        %v1110 = vpop.f32.mrf.mxu0
        %1111 = vdwg.mxu0
        %v1112 = vadd.f32 %v831, %v1107
        %s1113 = scalar_lea.vmem [#allocation5], 384
        %v1114 = vld [vmem:[%s1113] sm:$0xf]
        %v1115 = vld [vmem:[%s1113 + $0x4] sm:$0xf]
        %v1116 = vld [vmem:[%s1113 + $0x8] sm:$0xf]
        %v1117 = vld [vmem:[%s1113 + $0xc] sm:$0xf]
        %v1118 = vld [vmem:[%s1113 + $0x10] sm:$0xf]
        %v1119 = vld [vmem:[%s1113 + $0x14] sm:$0xf]
        %v1120 = vld [vmem:[%s1113 + $0x18] sm:$0xf]
        %v1121 = vld [vmem:[%s1113 + $0x1c] sm:$0xf]
        %v1122 = vld [vmem:[%s1113 + $0x20] sm:$0xf]
        %v1123 = vld [vmem:[%s1113 + $0x24] sm:$0xf]
        %v1124 = vld [vmem:[%s1113 + $0x28] sm:$0xf]
        %v1125 = vld [vmem:[%s1113 + $0x2c] sm:$0xf]
        %v1126 = vld [vmem:[%s1113 + $0x30] sm:$0xf]
        %v1127 = vld [vmem:[%s1113 + $0x34] sm:$0xf]
        %v1128 = vld [vmem:[%s1113 + $0x38] sm:$0xf]
        %v1129 = vld [vmem:[%s1113 + $0x3c] sm:$0xf]
        %v1130 = vld [vmem:[%s1113 + $0x40] sm:$0xf]
        %v1131 = vld [vmem:[%s1113 + $0x44] sm:$0xf]
        %v1132 = vld [vmem:[%s1113 + $0x48] sm:$0xf]
        %v1133 = vld [vmem:[%s1113 + $0x4c] sm:$0xf]
        %v1134 = vld [vmem:[%s1113 + $0x50] sm:$0xf]
        %v1135 = vld [vmem:[%s1113 + $0x54] sm:$0xf]
        %v1136 = vld [vmem:[%s1113 + $0x58] sm:$0xf]
        %v1137 = vld [vmem:[%s1113 + $0x5c] sm:$0xf]
        %v1138 = vld [vmem:[%s1113 + $0x60] sm:$0xf]
        %v1139 = vld [vmem:[%s1113 + $0x64] sm:$0xf]
        %v1140 = vld [vmem:[%s1113 + $0x68] sm:$0xf]
        %v1141 = vld [vmem:[%s1113 + $0x6c] sm:$0xf]
        %v1142 = vld [vmem:[%s1113 + $0x70] sm:$0xf]
        %v1143 = vld [vmem:[%s1113 + $0x74] sm:$0xf]
        %v1144 = vld [vmem:[%s1113 + $0x78] sm:$0xf]
        %v1145 = vld [vmem:[%s1113 + $0x7c] sm:$0xf]
        %v1178 = vunpack.c.l.b16 %v1114
        %v1179 = vunpack.c.l.b16 %v1115
        %v1180 = vunpack.c.l.b16 %v1116
        %v1181 = vunpack.c.l.b16 %v1117
        %v1182 = vunpack.c.l.b16 %v1118
        %v1183 = vunpack.c.l.b16 %v1119
        %v1184 = vunpack.c.l.b16 %v1120
        %v1185 = vunpack.c.l.b16 %v1121
        %v1186 = vunpack.c.l.b16 %v1122
        %v1187 = vunpack.c.l.b16 %v1123
        %v1188 = vunpack.c.l.b16 %v1124
        %v1189 = vunpack.c.l.b16 %v1125
        %v1190 = vunpack.c.l.b16 %v1126
        %v1191 = vunpack.c.l.b16 %v1127
        %v1192 = vunpack.c.l.b16 %v1128
        %v1193 = vunpack.c.l.b16 %v1129
        %v1194 = vunpack.c.l.b16 %v1130
        %v1195 = vunpack.c.l.b16 %v1131
        %v1196 = vunpack.c.l.b16 %v1132
        %v1197 = vunpack.c.l.b16 %v1133
        %v1198 = vunpack.c.l.b16 %v1134
        %v1199 = vunpack.c.l.b16 %v1135
        %v1200 = vunpack.c.l.b16 %v1136
        %v1201 = vunpack.c.l.b16 %v1137
        %v1202 = vunpack.c.l.b16 %v1138
        %v1203 = vunpack.c.l.b16 %v1139
        %v1204 = vunpack.c.l.b16 %v1140
        %v1205 = vunpack.c.l.b16 %v1141
        %v1206 = vunpack.c.l.b16 %v1142
        %v1207 = vunpack.c.l.b16 %v1143
        %v1208 = vunpack.c.l.b16 %v1144
        %v1209 = vunpack.c.l.b16 %v1145
        %v1210 = vpack.c.b16 %v1179, %v1178
        %v1211 = vpack.c.b16 %v1181, %v1180
        %v1212 = vpack.c.b16 %v1183, %v1182
        %v1213 = vpack.c.b16 %v1185, %v1184
        %v1214 = vpack.c.b16 %v1187, %v1186
        %v1215 = vpack.c.b16 %v1189, %v1188
        %v1216 = vpack.c.b16 %v1191, %v1190
        %v1217 = vpack.c.b16 %v1193, %v1192
        %v1218 = vpack.c.b16 %v1195, %v1194
        %v1219 = vpack.c.b16 %v1197, %v1196
        %v1220 = vpack.c.b16 %v1199, %v1198
        %v1221 = vpack.c.b16 %v1201, %v1200
        %v1222 = vpack.c.b16 %v1203, %v1202
        %v1223 = vpack.c.b16 %v1205, %v1204
        %v1224 = vpack.c.b16 %v1207, %v1206
        %v1225 = vpack.c.b16 %v1209, %v1208
        %1242 = vmatprep.subr.bf16.mxu0 0
        %1243 = vmatpush1.bf16.msra.mxu0 %v1217
        %1244 = vmatprep.subr.bf16.mxu0 0
        %1245 = vmatpush1.bf16.msra.mxu0 %v1216
        %1246 = vmatprep.subr.bf16.mxu0 0
        %1247 = vmatpush1.bf16.msra.mxu0 %v1215
        %1248 = vmatprep.subr.bf16.mxu0 0
        %1249 = vmatpush1.bf16.msra.mxu0 %v1214
        %1250 = vmatprep.subr.bf16.mxu0 0
        %1251 = vmatpush1.bf16.msra.mxu0 %v1213
        %1252 = vmatprep.subr.bf16.mxu0 0
        %1253 = vmatpush1.bf16.msra.mxu0 %v1212
        %1254 = vmatprep.subr.bf16.mxu0 0
        %1255 = vmatpush1.bf16.msra.mxu0 %v1211
        %1256 = vmatprep.subr.bf16.mxu0 0
        %1257 = vmatpush1.bf16.msra.mxu0 %v1210
        %1258 = vmatprep.subr.bf16.mxu0 0
        %1259 = vmatpush2.bf16.msra.mxu0 %v1225
        %1260 = vmatprep.subr.bf16.mxu0 0
        %1261 = vmatpush2.bf16.msra.mxu0 %v1224
        %1262 = vmatprep.subr.bf16.mxu0 0
        %1263 = vmatpush2.bf16.msra.mxu0 %v1223
        %1264 = vmatprep.subr.bf16.mxu0 0
        %1265 = vmatpush2.bf16.msra.mxu0 %v1222
        %1266 = vmatprep.subr.bf16.mxu0 0
        %1267 = vmatpush2.bf16.msra.mxu0 %v1221
        %1268 = vmatprep.subr.bf16.mxu0 0
        %1269 = vmatpush2.bf16.msra.mxu0 %v1220
        %1270 = vmatprep.subr.bf16.mxu0 0
        %1271 = vmatpush2.bf16.msra.mxu0 %v1219
        %1272 = vmatprep.subr.bf16.mxu0 0
        %1273 = vmatpush2.bf16.msra.mxu0 %v1218
        %1274 = vmatprep.mubr.bf16.mxu0 %v315
        %1275 = vmatmul.mubr.bf16.gmra.mxu0 %v314
        %v1276 = vpop.f32.mrf.mxu0
        %v1277 = vadd.f32 %v309, %v1276
        %v1278 = vpop.f32.mrf.mxu0
        %v1279 = vpop.f32.mrf.mxu0
        %v1280 = vpop.f32.mrf.mxu0
        %1281 = vdwg.mxu0
        %v1282 = vmax.f32 %v1277, 0.0
        %v1283 = vpack.c.bf16 %v1282, %v1282
        %s1284 = scalar_lea.vmem [#allocation7], 192
        %v1285 = vld [vmem:[%s1284] sm:$0xf]
        %v1286 = vld [vmem:[%s1284 + $0x4] sm:$0xf]
        %v1287 = vld [vmem:[%s1284 + $0x8] sm:$0xf]
        %v1288 = vld [vmem:[%s1284 + $0xc] sm:$0xf]
        %v1289 = vld [vmem:[%s1284 + $0x10] sm:$0xf]
        %v1290 = vld [vmem:[%s1284 + $0x14] sm:$0xf]
        %v1291 = vld [vmem:[%s1284 + $0x18] sm:$0xf]
        %v1292 = vld [vmem:[%s1284 + $0x1c] sm:$0xf]
        %v1293 = vld [vmem:[%s1284 + $0x20] sm:$0xf]
        %v1294 = vld [vmem:[%s1284 + $0x24] sm:$0xf]
        %v1295 = vld [vmem:[%s1284 + $0x28] sm:$0xf]
        %v1296 = vld [vmem:[%s1284 + $0x2c] sm:$0xf]
        %v1297 = vld [vmem:[%s1284 + $0x30] sm:$0xf]
        %v1298 = vld [vmem:[%s1284 + $0x34] sm:$0xf]
        %v1299 = vld [vmem:[%s1284 + $0x38] sm:$0xf]
        %v1300 = vld [vmem:[%s1284 + $0x3c] sm:$0xf]
        %v1317 = vunpack.c.l.b16 %v1285
        %v1318 = vunpack.c.l.b16 %v1286
        %v1319 = vunpack.c.l.b16 %v1287
        %v1320 = vunpack.c.l.b16 %v1288
        %v1321 = vunpack.c.l.b16 %v1289
        %v1322 = vunpack.c.l.b16 %v1290
        %v1323 = vunpack.c.l.b16 %v1291
        %v1324 = vunpack.c.l.b16 %v1292
        %v1325 = vunpack.c.l.b16 %v1293
        %v1326 = vunpack.c.l.b16 %v1294
        %v1327 = vunpack.c.l.b16 %v1295
        %v1328 = vunpack.c.l.b16 %v1296
        %v1329 = vunpack.c.l.b16 %v1297
        %v1330 = vunpack.c.l.b16 %v1298
        %v1331 = vunpack.c.l.b16 %v1299
        %v1332 = vunpack.c.l.b16 %v1300
        %v1333 = vpack.c.b16 %v1318, %v1317
        %v1334 = vpack.c.b16 %v1320, %v1319
        %v1335 = vpack.c.b16 %v1322, %v1321
        %v1336 = vpack.c.b16 %v1324, %v1323
        %v1337 = vpack.c.b16 %v1326, %v1325
        %v1338 = vpack.c.b16 %v1328, %v1327
        %v1339 = vpack.c.b16 %v1330, %v1329
        %v1340 = vpack.c.b16 %v1332, %v1331
        %1349 = vmatprep.subr.bf16.mxu0 0
        %1350 = vmatpush1.bf16.msra.mxu0 %v1340
        %1351 = vmatprep.subr.bf16.mxu0 0
        %1352 = vmatpush1.bf16.msra.mxu0 %v1339
        %1353 = vmatprep.subr.bf16.mxu0 0
        %1354 = vmatpush1.bf16.msra.mxu0 %v1338
        %1355 = vmatprep.subr.bf16.mxu0 0
        %1356 = vmatpush1.bf16.msra.mxu0 %v1337
        %1357 = vmatprep.subr.bf16.mxu0 0
        %1358 = vmatpush1.bf16.msra.mxu0 %v1336
        %1359 = vmatprep.subr.bf16.mxu0 0
        %1360 = vmatpush1.bf16.msra.mxu0 %v1335
        %1361 = vmatprep.subr.bf16.mxu0 0
        %1362 = vmatpush1.bf16.msra.mxu0 %v1334
        %1363 = vmatprep.subr.bf16.mxu0 0
        %1364 = vmatpush1.bf16.msra.mxu0 %v1333
        %1365 = vmatprep.subr.bf16.mxu0 0
        %1366 = vmatpush2.bf16.msra.mxu0 0
        %1367 = vmatprep.subr.bf16.mxu0 0
        %1368 = vmatpush2.bf16.msra.mxu0 0
        %1369 = vmatprep.subr.bf16.mxu0 0
        %1370 = vmatpush2.bf16.msra.mxu0 0
        %1371 = vmatprep.subr.bf16.mxu0 0
        %1372 = vmatpush2.bf16.msra.mxu0 0
        %1373 = vmatprep.subr.bf16.mxu0 0
        %1374 = vmatpush2.bf16.msra.mxu0 0
        %1375 = vmatprep.subr.bf16.mxu0 0
        %1376 = vmatpush2.bf16.msra.mxu0 0
        %1377 = vmatprep.subr.bf16.mxu0 0
        %1378 = vmatpush2.bf16.msra.mxu0 0
        %1379 = vmatprep.subr.bf16.mxu0 0
        %1380 = vmatpush2.bf16.msra.mxu0 0
        %1381 = vmatprep.mubr.bf16.mxu0 0
        %1382 = vmatmul.mubr.bf16.gmra.mxu0 %v1283
        %v1383 = vpop.f32.mrf.mxu0
        %v1384 = vadd.f32 0.0, %v1383
        %v1385 = vpop.f32.mrf.mxu0
        %v1386 = vpop.f32.mrf.mxu0
        %v1387 = vpop.f32.mrf.mxu0
        %1388 = vdwg.mxu0
        %v1389 = vadd.f32 %v1112, %v1384
        %s1390 = scalar_lea.vmem [#allocation5], 512
        %v1391 = vld [vmem:[%s1390] sm:$0xf]
        %v1392 = vld [vmem:[%s1390 + $0x4] sm:$0xf]
        %v1393 = vld [vmem:[%s1390 + $0x8] sm:$0xf]
        %v1394 = vld [vmem:[%s1390 + $0xc] sm:$0xf]
        %v1395 = vld [vmem:[%s1390 + $0x10] sm:$0xf]
        %v1396 = vld [vmem:[%s1390 + $0x14] sm:$0xf]
        %v1397 = vld [vmem:[%s1390 + $0x18] sm:$0xf]
        %v1398 = vld [vmem:[%s1390 + $0x1c] sm:$0xf]
        %v1399 = vld [vmem:[%s1390 + $0x20] sm:$0xf]
        %v1400 = vld [vmem:[%s1390 + $0x24] sm:$0xf]
        %v1401 = vld [vmem:[%s1390 + $0x28] sm:$0xf]
        %v1402 = vld [vmem:[%s1390 + $0x2c] sm:$0xf]
        %v1403 = vld [vmem:[%s1390 + $0x30] sm:$0xf]
        %v1404 = vld [vmem:[%s1390 + $0x34] sm:$0xf]
        %v1405 = vld [vmem:[%s1390 + $0x38] sm:$0xf]
        %v1406 = vld [vmem:[%s1390 + $0x3c] sm:$0xf]
        %v1407 = vld [vmem:[%s1390 + $0x40] sm:$0xf]
        %v1408 = vld [vmem:[%s1390 + $0x44] sm:$0xf]
        %v1409 = vld [vmem:[%s1390 + $0x48] sm:$0xf]
        %v1410 = vld [vmem:[%s1390 + $0x4c] sm:$0xf]
        %v1411 = vld [vmem:[%s1390 + $0x50] sm:$0xf]
        %v1412 = vld [vmem:[%s1390 + $0x54] sm:$0xf]
        %v1413 = vld [vmem:[%s1390 + $0x58] sm:$0xf]
        %v1414 = vld [vmem:[%s1390 + $0x5c] sm:$0xf]
        %v1415 = vld [vmem:[%s1390 + $0x60] sm:$0xf]
        %v1416 = vld [vmem:[%s1390 + $0x64] sm:$0xf]
        %v1417 = vld [vmem:[%s1390 + $0x68] sm:$0xf]
        %v1418 = vld [vmem:[%s1390 + $0x6c] sm:$0xf]
        %v1419 = vld [vmem:[%s1390 + $0x70] sm:$0xf]
        %v1420 = vld [vmem:[%s1390 + $0x74] sm:$0xf]
        %v1421 = vld [vmem:[%s1390 + $0x78] sm:$0xf]
        %v1422 = vld [vmem:[%s1390 + $0x7c] sm:$0xf]
        %v1455 = vunpack.c.l.b16 %v1391
        %v1456 = vunpack.c.l.b16 %v1392
        %v1457 = vunpack.c.l.b16 %v1393
        %v1458 = vunpack.c.l.b16 %v1394
        %v1459 = vunpack.c.l.b16 %v1395
        %v1460 = vunpack.c.l.b16 %v1396
        %v1461 = vunpack.c.l.b16 %v1397
        %v1462 = vunpack.c.l.b16 %v1398
        %v1463 = vunpack.c.l.b16 %v1399
        %v1464 = vunpack.c.l.b16 %v1400
        %v1465 = vunpack.c.l.b16 %v1401
        %v1466 = vunpack.c.l.b16 %v1402
        %v1467 = vunpack.c.l.b16 %v1403
        %v1468 = vunpack.c.l.b16 %v1404
        %v1469 = vunpack.c.l.b16 %v1405
        %v1470 = vunpack.c.l.b16 %v1406
        %v1471 = vunpack.c.l.b16 %v1407
        %v1472 = vunpack.c.l.b16 %v1408
        %v1473 = vunpack.c.l.b16 %v1409
        %v1474 = vunpack.c.l.b16 %v1410
        %v1475 = vunpack.c.l.b16 %v1411
        %v1476 = vunpack.c.l.b16 %v1412
        %v1477 = vunpack.c.l.b16 %v1413
        %v1478 = vunpack.c.l.b16 %v1414
        %v1479 = vunpack.c.l.b16 %v1415
        %v1480 = vunpack.c.l.b16 %v1416
        %v1481 = vunpack.c.l.b16 %v1417
        %v1482 = vunpack.c.l.b16 %v1418
        %v1483 = vunpack.c.l.b16 %v1419
        %v1484 = vunpack.c.l.b16 %v1420
        %v1485 = vunpack.c.l.b16 %v1421
        %v1486 = vunpack.c.l.b16 %v1422
        %v1487 = vpack.c.b16 %v1456, %v1455
        %v1488 = vpack.c.b16 %v1458, %v1457
        %v1489 = vpack.c.b16 %v1460, %v1459
        %v1490 = vpack.c.b16 %v1462, %v1461
        %v1491 = vpack.c.b16 %v1464, %v1463
        %v1492 = vpack.c.b16 %v1466, %v1465
        %v1493 = vpack.c.b16 %v1468, %v1467
        %v1494 = vpack.c.b16 %v1470, %v1469
        %v1495 = vpack.c.b16 %v1472, %v1471
        %v1496 = vpack.c.b16 %v1474, %v1473
        %v1497 = vpack.c.b16 %v1476, %v1475
        %v1498 = vpack.c.b16 %v1478, %v1477
        %v1499 = vpack.c.b16 %v1480, %v1479
        %v1500 = vpack.c.b16 %v1482, %v1481
        %v1501 = vpack.c.b16 %v1484, %v1483
        %v1502 = vpack.c.b16 %v1486, %v1485
        %1519 = vmatprep.subr.bf16.mxu0 0
        %1520 = vmatpush1.bf16.msra.mxu0 %v1494
        %1521 = vmatprep.subr.bf16.mxu0 0
        %1522 = vmatpush1.bf16.msra.mxu0 %v1493
        %1523 = vmatprep.subr.bf16.mxu0 0
        %1524 = vmatpush1.bf16.msra.mxu0 %v1492
        %1525 = vmatprep.subr.bf16.mxu0 0
        %1526 = vmatpush1.bf16.msra.mxu0 %v1491
        %1527 = vmatprep.subr.bf16.mxu0 0
        %1528 = vmatpush1.bf16.msra.mxu0 %v1490
        %1529 = vmatprep.subr.bf16.mxu0 0
        %1530 = vmatpush1.bf16.msra.mxu0 %v1489
        %1531 = vmatprep.subr.bf16.mxu0 0
        %1532 = vmatpush1.bf16.msra.mxu0 %v1488
        %1533 = vmatprep.subr.bf16.mxu0 0
        %1534 = vmatpush1.bf16.msra.mxu0 %v1487
        %1535 = vmatprep.subr.bf16.mxu0 0
        %1536 = vmatpush2.bf16.msra.mxu0 %v1502
        %1537 = vmatprep.subr.bf16.mxu0 0
        %1538 = vmatpush2.bf16.msra.mxu0 %v1501
        %1539 = vmatprep.subr.bf16.mxu0 0
        %1540 = vmatpush2.bf16.msra.mxu0 %v1500
        %1541 = vmatprep.subr.bf16.mxu0 0
        %1542 = vmatpush2.bf16.msra.mxu0 %v1499
        %1543 = vmatprep.subr.bf16.mxu0 0
        %1544 = vmatpush2.bf16.msra.mxu0 %v1498
        %1545 = vmatprep.subr.bf16.mxu0 0
        %1546 = vmatpush2.bf16.msra.mxu0 %v1497
        %1547 = vmatprep.subr.bf16.mxu0 0
        %1548 = vmatpush2.bf16.msra.mxu0 %v1496
        %1549 = vmatprep.subr.bf16.mxu0 0
        %1550 = vmatpush2.bf16.msra.mxu0 %v1495
        %1551 = vmatprep.mubr.bf16.mxu0 %v315
        %1552 = vmatmul.mubr.bf16.gmra.mxu0 %v314
        %v1553 = vpop.f32.mrf.mxu0
        %v1554 = vadd.f32 %v309, %v1553
        %v1555 = vpop.f32.mrf.mxu0
        %v1556 = vpop.f32.mrf.mxu0
        %v1557 = vpop.f32.mrf.mxu0
        %1558 = vdwg.mxu0
        %v1559 = vmax.f32 %v1554, 0.0
        %v1560 = vpack.c.bf16 %v1559, %v1559
        %s1561 = scalar_lea.vmem [#allocation7], 256
        %v1562 = vld [vmem:[%s1561] sm:$0xf]
        %v1563 = vld [vmem:[%s1561 + $0x4] sm:$0xf]
        %v1564 = vld [vmem:[%s1561 + $0x8] sm:$0xf]
        %v1565 = vld [vmem:[%s1561 + $0xc] sm:$0xf]
        %v1566 = vld [vmem:[%s1561 + $0x10] sm:$0xf]
        %v1567 = vld [vmem:[%s1561 + $0x14] sm:$0xf]
        %v1568 = vld [vmem:[%s1561 + $0x18] sm:$0xf]
        %v1569 = vld [vmem:[%s1561 + $0x1c] sm:$0xf]
        %v1570 = vld [vmem:[%s1561 + $0x20] sm:$0xf]
        %v1571 = vld [vmem:[%s1561 + $0x24] sm:$0xf]
        %v1572 = vld [vmem:[%s1561 + $0x28] sm:$0xf]
        %v1573 = vld [vmem:[%s1561 + $0x2c] sm:$0xf]
        %v1574 = vld [vmem:[%s1561 + $0x30] sm:$0xf]
        %v1575 = vld [vmem:[%s1561 + $0x34] sm:$0xf]
        %v1576 = vld [vmem:[%s1561 + $0x38] sm:$0xf]
        %v1577 = vld [vmem:[%s1561 + $0x3c] sm:$0xf]
        %v1594 = vunpack.c.l.b16 %v1562
        %v1595 = vunpack.c.l.b16 %v1563
        %v1596 = vunpack.c.l.b16 %v1564
        %v1597 = vunpack.c.l.b16 %v1565
        %v1598 = vunpack.c.l.b16 %v1566
        %v1599 = vunpack.c.l.b16 %v1567
        %v1600 = vunpack.c.l.b16 %v1568
        %v1601 = vunpack.c.l.b16 %v1569
        %v1602 = vunpack.c.l.b16 %v1570
        %v1603 = vunpack.c.l.b16 %v1571
        %v1604 = vunpack.c.l.b16 %v1572
        %v1605 = vunpack.c.l.b16 %v1573
        %v1606 = vunpack.c.l.b16 %v1574
        %v1607 = vunpack.c.l.b16 %v1575
        %v1608 = vunpack.c.l.b16 %v1576
        %v1609 = vunpack.c.l.b16 %v1577
        %v1610 = vpack.c.b16 %v1595, %v1594
        %v1611 = vpack.c.b16 %v1597, %v1596
        %v1612 = vpack.c.b16 %v1599, %v1598
        %v1613 = vpack.c.b16 %v1601, %v1600
        %v1614 = vpack.c.b16 %v1603, %v1602
        %v1615 = vpack.c.b16 %v1605, %v1604
        %v1616 = vpack.c.b16 %v1607, %v1606
        %v1617 = vpack.c.b16 %v1609, %v1608
        %1626 = vmatprep.subr.bf16.mxu0 0
        %1627 = vmatpush1.bf16.msra.mxu0 %v1617
        %1628 = vmatprep.subr.bf16.mxu0 0
        %1629 = vmatpush1.bf16.msra.mxu0 %v1616
        %1630 = vmatprep.subr.bf16.mxu0 0
        %1631 = vmatpush1.bf16.msra.mxu0 %v1615
        %1632 = vmatprep.subr.bf16.mxu0 0
        %1633 = vmatpush1.bf16.msra.mxu0 %v1614
        %1634 = vmatprep.subr.bf16.mxu0 0
        %1635 = vmatpush1.bf16.msra.mxu0 %v1613
        %1636 = vmatprep.subr.bf16.mxu0 0
        %1637 = vmatpush1.bf16.msra.mxu0 %v1612
        %1638 = vmatprep.subr.bf16.mxu0 0
        %1639 = vmatpush1.bf16.msra.mxu0 %v1611
        %1640 = vmatprep.subr.bf16.mxu0 0
        %1641 = vmatpush1.bf16.msra.mxu0 %v1610
        %1642 = vmatprep.subr.bf16.mxu0 0
        %1643 = vmatpush2.bf16.msra.mxu0 0
        %1644 = vmatprep.subr.bf16.mxu0 0
        %1645 = vmatpush2.bf16.msra.mxu0 0
        %1646 = vmatprep.subr.bf16.mxu0 0
        %1647 = vmatpush2.bf16.msra.mxu0 0
        %1648 = vmatprep.subr.bf16.mxu0 0
        %1649 = vmatpush2.bf16.msra.mxu0 0
        %1650 = vmatprep.subr.bf16.mxu0 0
        %1651 = vmatpush2.bf16.msra.mxu0 0
        %1652 = vmatprep.subr.bf16.mxu0 0
        %1653 = vmatpush2.bf16.msra.mxu0 0
        %1654 = vmatprep.subr.bf16.mxu0 0
        %1655 = vmatpush2.bf16.msra.mxu0 0
        %1656 = vmatprep.subr.bf16.mxu0 0
        %1657 = vmatpush2.bf16.msra.mxu0 0
        %1658 = vmatprep.mubr.bf16.mxu0 0
        %1659 = vmatmul.mubr.bf16.gmra.mxu0 %v1560
        %v1660 = vpop.f32.mrf.mxu0
        %v1661 = vadd.f32 0.0, %v1660
        %v1662 = vpop.f32.mrf.mxu0
        %v1663 = vpop.f32.mrf.mxu0
        %v1664 = vpop.f32.mrf.mxu0
        %1665 = vdwg.mxu0
        %v1666 = vadd.f32 %v1389, %v1661
        %s1667 = scalar_lea.vmem [#allocation5], 640
        %v1668 = vld [vmem:[%s1667] sm:$0xf]
        %v1669 = vld [vmem:[%s1667 + $0x4] sm:$0xf]
        %v1670 = vld [vmem:[%s1667 + $0x8] sm:$0xf]
        %v1671 = vld [vmem:[%s1667 + $0xc] sm:$0xf]
        %v1672 = vld [vmem:[%s1667 + $0x10] sm:$0xf]
        %v1673 = vld [vmem:[%s1667 + $0x14] sm:$0xf]
        %v1674 = vld [vmem:[%s1667 + $0x18] sm:$0xf]
        %v1675 = vld [vmem:[%s1667 + $0x1c] sm:$0xf]
        %v1676 = vld [vmem:[%s1667 + $0x20] sm:$0xf]
        %v1677 = vld [vmem:[%s1667 + $0x24] sm:$0xf]
        %v1678 = vld [vmem:[%s1667 + $0x28] sm:$0xf]
        %v1679 = vld [vmem:[%s1667 + $0x2c] sm:$0xf]
        %v1680 = vld [vmem:[%s1667 + $0x30] sm:$0xf]
        %v1681 = vld [vmem:[%s1667 + $0x34] sm:$0xf]
        %v1682 = vld [vmem:[%s1667 + $0x38] sm:$0xf]
        %v1683 = vld [vmem:[%s1667 + $0x3c] sm:$0xf]
        %v1684 = vld [vmem:[%s1667 + $0x40] sm:$0xf]
        %v1685 = vld [vmem:[%s1667 + $0x44] sm:$0xf]
        %v1686 = vld [vmem:[%s1667 + $0x48] sm:$0xf]
        %v1687 = vld [vmem:[%s1667 + $0x4c] sm:$0xf]
        %v1688 = vld [vmem:[%s1667 + $0x50] sm:$0xf]
        %v1689 = vld [vmem:[%s1667 + $0x54] sm:$0xf]
        %v1690 = vld [vmem:[%s1667 + $0x58] sm:$0xf]
        %v1691 = vld [vmem:[%s1667 + $0x5c] sm:$0xf]
        %v1692 = vld [vmem:[%s1667 + $0x60] sm:$0xf]
        %v1693 = vld [vmem:[%s1667 + $0x64] sm:$0xf]
        %v1694 = vld [vmem:[%s1667 + $0x68] sm:$0xf]
        %v1695 = vld [vmem:[%s1667 + $0x6c] sm:$0xf]
        %v1696 = vld [vmem:[%s1667 + $0x70] sm:$0xf]
        %v1697 = vld [vmem:[%s1667 + $0x74] sm:$0xf]
        %v1698 = vld [vmem:[%s1667 + $0x78] sm:$0xf]
        %v1699 = vld [vmem:[%s1667 + $0x7c] sm:$0xf]
        %v1732 = vunpack.c.l.b16 %v1668
        %v1733 = vunpack.c.l.b16 %v1669
        %v1734 = vunpack.c.l.b16 %v1670
        %v1735 = vunpack.c.l.b16 %v1671
        %v1736 = vunpack.c.l.b16 %v1672
        %v1737 = vunpack.c.l.b16 %v1673
        %v1738 = vunpack.c.l.b16 %v1674
        %v1739 = vunpack.c.l.b16 %v1675
        %v1740 = vunpack.c.l.b16 %v1676
        %v1741 = vunpack.c.l.b16 %v1677
        %v1742 = vunpack.c.l.b16 %v1678
        %v1743 = vunpack.c.l.b16 %v1679
        %v1744 = vunpack.c.l.b16 %v1680
        %v1745 = vunpack.c.l.b16 %v1681
        %v1746 = vunpack.c.l.b16 %v1682
        %v1747 = vunpack.c.l.b16 %v1683
        %v1748 = vunpack.c.l.b16 %v1684
        %v1749 = vunpack.c.l.b16 %v1685
        %v1750 = vunpack.c.l.b16 %v1686
        %v1751 = vunpack.c.l.b16 %v1687
        %v1752 = vunpack.c.l.b16 %v1688
        %v1753 = vunpack.c.l.b16 %v1689
        %v1754 = vunpack.c.l.b16 %v1690
        %v1755 = vunpack.c.l.b16 %v1691
        %v1756 = vunpack.c.l.b16 %v1692
        %v1757 = vunpack.c.l.b16 %v1693
        %v1758 = vunpack.c.l.b16 %v1694
        %v1759 = vunpack.c.l.b16 %v1695
        %v1760 = vunpack.c.l.b16 %v1696
        %v1761 = vunpack.c.l.b16 %v1697
        %v1762 = vunpack.c.l.b16 %v1698
        %v1763 = vunpack.c.l.b16 %v1699
        %v1764 = vpack.c.b16 %v1733, %v1732
        %v1765 = vpack.c.b16 %v1735, %v1734
        %v1766 = vpack.c.b16 %v1737, %v1736
        %v1767 = vpack.c.b16 %v1739, %v1738
        %v1768 = vpack.c.b16 %v1741, %v1740
        %v1769 = vpack.c.b16 %v1743, %v1742
        %v1770 = vpack.c.b16 %v1745, %v1744
        %v1771 = vpack.c.b16 %v1747, %v1746
        %v1772 = vpack.c.b16 %v1749, %v1748
        %v1773 = vpack.c.b16 %v1751, %v1750
        %v1774 = vpack.c.b16 %v1753, %v1752
        %v1775 = vpack.c.b16 %v1755, %v1754
        %v1776 = vpack.c.b16 %v1757, %v1756
        %v1777 = vpack.c.b16 %v1759, %v1758
        %v1778 = vpack.c.b16 %v1761, %v1760
        %v1779 = vpack.c.b16 %v1763, %v1762
        %1796 = vmatprep.subr.bf16.mxu0 0
        %1797 = vmatpush1.bf16.msra.mxu0 %v1771
        %1798 = vmatprep.subr.bf16.mxu0 0
        %1799 = vmatpush1.bf16.msra.mxu0 %v1770
        %1800 = vmatprep.subr.bf16.mxu0 0
        %1801 = vmatpush1.bf16.msra.mxu0 %v1769
        %1802 = vmatprep.subr.bf16.mxu0 0
        %1803 = vmatpush1.bf16.msra.mxu0 %v1768
        %1804 = vmatprep.subr.bf16.mxu0 0
        %1805 = vmatpush1.bf16.msra.mxu0 %v1767
        %1806 = vmatprep.subr.bf16.mxu0 0
        %1807 = vmatpush1.bf16.msra.mxu0 %v1766
        %1808 = vmatprep.subr.bf16.mxu0 0
        %1809 = vmatpush1.bf16.msra.mxu0 %v1765
        %1810 = vmatprep.subr.bf16.mxu0 0
        %1811 = vmatpush1.bf16.msra.mxu0 %v1764
        %1812 = vmatprep.subr.bf16.mxu0 0
        %1813 = vmatpush2.bf16.msra.mxu0 %v1779
        %1814 = vmatprep.subr.bf16.mxu0 0
        %1815 = vmatpush2.bf16.msra.mxu0 %v1778
        %1816 = vmatprep.subr.bf16.mxu0 0
        %1817 = vmatpush2.bf16.msra.mxu0 %v1777
        %1818 = vmatprep.subr.bf16.mxu0 0
        %1819 = vmatpush2.bf16.msra.mxu0 %v1776
        %1820 = vmatprep.subr.bf16.mxu0 0
        %1821 = vmatpush2.bf16.msra.mxu0 %v1775
        %1822 = vmatprep.subr.bf16.mxu0 0
        %1823 = vmatpush2.bf16.msra.mxu0 %v1774
        %1824 = vmatprep.subr.bf16.mxu0 0
        %1825 = vmatpush2.bf16.msra.mxu0 %v1773
        %1826 = vmatprep.subr.bf16.mxu0 0
        %1827 = vmatpush2.bf16.msra.mxu0 %v1772
        %1828 = vmatprep.mubr.bf16.mxu0 %v315
        %1829 = vmatmul.mubr.bf16.gmra.mxu0 %v314
        %v1830 = vpop.f32.mrf.mxu0
        %v1831 = vadd.f32 %v309, %v1830
        %v1832 = vpop.f32.mrf.mxu0
        %v1833 = vpop.f32.mrf.mxu0
        %v1834 = vpop.f32.mrf.mxu0
        %1835 = vdwg.mxu0
        %v1836 = vmax.f32 %v1831, 0.0
        %v1837 = vpack.c.bf16 %v1836, %v1836
        %s1838 = scalar_lea.vmem [#allocation7], 320
        %v1839 = vld [vmem:[%s1838] sm:$0xf]
        %v1840 = vld [vmem:[%s1838 + $0x4] sm:$0xf]
        %v1841 = vld [vmem:[%s1838 + $0x8] sm:$0xf]
        %v1842 = vld [vmem:[%s1838 + $0xc] sm:$0xf]
        %v1843 = vld [vmem:[%s1838 + $0x10] sm:$0xf]
        %v1844 = vld [vmem:[%s1838 + $0x14] sm:$0xf]
        %v1845 = vld [vmem:[%s1838 + $0x18] sm:$0xf]
        %v1846 = vld [vmem:[%s1838 + $0x1c] sm:$0xf]
        %v1847 = vld [vmem:[%s1838 + $0x20] sm:$0xf]
        %v1848 = vld [vmem:[%s1838 + $0x24] sm:$0xf]
        %v1849 = vld [vmem:[%s1838 + $0x28] sm:$0xf]
        %v1850 = vld [vmem:[%s1838 + $0x2c] sm:$0xf]
        %v1851 = vld [vmem:[%s1838 + $0x30] sm:$0xf]
        %v1852 = vld [vmem:[%s1838 + $0x34] sm:$0xf]
        %v1853 = vld [vmem:[%s1838 + $0x38] sm:$0xf]
        %v1854 = vld [vmem:[%s1838 + $0x3c] sm:$0xf]
        %v1871 = vunpack.c.l.b16 %v1839
        %v1872 = vunpack.c.l.b16 %v1840
        %v1873 = vunpack.c.l.b16 %v1841
        %v1874 = vunpack.c.l.b16 %v1842
        %v1875 = vunpack.c.l.b16 %v1843
        %v1876 = vunpack.c.l.b16 %v1844
        %v1877 = vunpack.c.l.b16 %v1845
        %v1878 = vunpack.c.l.b16 %v1846
        %v1879 = vunpack.c.l.b16 %v1847
        %v1880 = vunpack.c.l.b16 %v1848
        %v1881 = vunpack.c.l.b16 %v1849
        %v1882 = vunpack.c.l.b16 %v1850
        %v1883 = vunpack.c.l.b16 %v1851
        %v1884 = vunpack.c.l.b16 %v1852
        %v1885 = vunpack.c.l.b16 %v1853
        %v1886 = vunpack.c.l.b16 %v1854
        %v1887 = vpack.c.b16 %v1872, %v1871
        %v1888 = vpack.c.b16 %v1874, %v1873
        %v1889 = vpack.c.b16 %v1876, %v1875
        %v1890 = vpack.c.b16 %v1878, %v1877
        %v1891 = vpack.c.b16 %v1880, %v1879
        %v1892 = vpack.c.b16 %v1882, %v1881
        %v1893 = vpack.c.b16 %v1884, %v1883
        %v1894 = vpack.c.b16 %v1886, %v1885
        %1903 = vmatprep.subr.bf16.mxu0 0
        %1904 = vmatpush1.bf16.msra.mxu0 %v1894
        %1905 = vmatprep.subr.bf16.mxu0 0
        %1906 = vmatpush1.bf16.msra.mxu0 %v1893
        %1907 = vmatprep.subr.bf16.mxu0 0
        %1908 = vmatpush1.bf16.msra.mxu0 %v1892
        %1909 = vmatprep.subr.bf16.mxu0 0
        %1910 = vmatpush1.bf16.msra.mxu0 %v1891
        %1911 = vmatprep.subr.bf16.mxu0 0
        %1912 = vmatpush1.bf16.msra.mxu0 %v1890
        %1913 = vmatprep.subr.bf16.mxu0 0
        %1914 = vmatpush1.bf16.msra.mxu0 %v1889
        %1915 = vmatprep.subr.bf16.mxu0 0
        %1916 = vmatpush1.bf16.msra.mxu0 %v1888
        %1917 = vmatprep.subr.bf16.mxu0 0
        %1918 = vmatpush1.bf16.msra.mxu0 %v1887
        %1919 = vmatprep.subr.bf16.mxu0 0
        %1920 = vmatpush2.bf16.msra.mxu0 0
        %1921 = vmatprep.subr.bf16.mxu0 0
        %1922 = vmatpush2.bf16.msra.mxu0 0
        %1923 = vmatprep.subr.bf16.mxu0 0
        %1924 = vmatpush2.bf16.msra.mxu0 0
        %1925 = vmatprep.subr.bf16.mxu0 0
        %1926 = vmatpush2.bf16.msra.mxu0 0
        %1927 = vmatprep.subr.bf16.mxu0 0
        %1928 = vmatpush2.bf16.msra.mxu0 0
        %1929 = vmatprep.subr.bf16.mxu0 0
        %1930 = vmatpush2.bf16.msra.mxu0 0
        %1931 = vmatprep.subr.bf16.mxu0 0
        %1932 = vmatpush2.bf16.msra.mxu0 0
        %1933 = vmatprep.subr.bf16.mxu0 0
        %1934 = vmatpush2.bf16.msra.mxu0 0
        %1935 = vmatprep.mubr.bf16.mxu0 0
        %1936 = vmatmul.mubr.bf16.gmra.mxu0 %v1837
        %v1937 = vpop.f32.mrf.mxu0
        %v1938 = vadd.f32 0.0, %v1937
        %v1939 = vpop.f32.mrf.mxu0
        %v1940 = vpop.f32.mrf.mxu0
        %v1941 = vpop.f32.mrf.mxu0
        %1942 = vdwg.mxu0
        %v1943 = vadd.f32 %v1666, %v1938
        %s1944 = scalar_lea.vmem [#allocation5], 768
        %v1945 = vld [vmem:[%s1944] sm:$0xf]
        %v1946 = vld [vmem:[%s1944 + $0x4] sm:$0xf]
        %v1947 = vld [vmem:[%s1944 + $0x8] sm:$0xf]
        %v1948 = vld [vmem:[%s1944 + $0xc] sm:$0xf]
        %v1949 = vld [vmem:[%s1944 + $0x10] sm:$0xf]
        %v1950 = vld [vmem:[%s1944 + $0x14] sm:$0xf]
        %v1951 = vld [vmem:[%s1944 + $0x18] sm:$0xf]
        %v1952 = vld [vmem:[%s1944 + $0x1c] sm:$0xf]
        %v1953 = vld [vmem:[%s1944 + $0x20] sm:$0xf]
        %v1954 = vld [vmem:[%s1944 + $0x24] sm:$0xf]
        %v1955 = vld [vmem:[%s1944 + $0x28] sm:$0xf]
        %v1956 = vld [vmem:[%s1944 + $0x2c] sm:$0xf]
        %v1957 = vld [vmem:[%s1944 + $0x30] sm:$0xf]
        %v1958 = vld [vmem:[%s1944 + $0x34] sm:$0xf]
        %v1959 = vld [vmem:[%s1944 + $0x38] sm:$0xf]
        %v1960 = vld [vmem:[%s1944 + $0x3c] sm:$0xf]
        %v1961 = vld [vmem:[%s1944 + $0x40] sm:$0xf]
        %v1962 = vld [vmem:[%s1944 + $0x44] sm:$0xf]
        %v1963 = vld [vmem:[%s1944 + $0x48] sm:$0xf]
        %v1964 = vld [vmem:[%s1944 + $0x4c] sm:$0xf]
        %v1965 = vld [vmem:[%s1944 + $0x50] sm:$0xf]
        %v1966 = vld [vmem:[%s1944 + $0x54] sm:$0xf]
        %v1967 = vld [vmem:[%s1944 + $0x58] sm:$0xf]
        %v1968 = vld [vmem:[%s1944 + $0x5c] sm:$0xf]
        %v1969 = vld [vmem:[%s1944 + $0x60] sm:$0xf]
        %v1970 = vld [vmem:[%s1944 + $0x64] sm:$0xf]
        %v1971 = vld [vmem:[%s1944 + $0x68] sm:$0xf]
        %v1972 = vld [vmem:[%s1944 + $0x6c] sm:$0xf]
        %v1973 = vld [vmem:[%s1944 + $0x70] sm:$0xf]
        %v1974 = vld [vmem:[%s1944 + $0x74] sm:$0xf]
        %v1975 = vld [vmem:[%s1944 + $0x78] sm:$0xf]
        %v1976 = vld [vmem:[%s1944 + $0x7c] sm:$0xf]
        %v2009 = vunpack.c.l.b16 %v1945
        %v2010 = vunpack.c.l.b16 %v1946
        %v2011 = vunpack.c.l.b16 %v1947
        %v2012 = vunpack.c.l.b16 %v1948
        %v2013 = vunpack.c.l.b16 %v1949
        %v2014 = vunpack.c.l.b16 %v1950
        %v2015 = vunpack.c.l.b16 %v1951
        %v2016 = vunpack.c.l.b16 %v1952
        %v2017 = vunpack.c.l.b16 %v1953
        %v2018 = vunpack.c.l.b16 %v1954
        %v2019 = vunpack.c.l.b16 %v1955
        %v2020 = vunpack.c.l.b16 %v1956
        %v2021 = vunpack.c.l.b16 %v1957
        %v2022 = vunpack.c.l.b16 %v1958
        %v2023 = vunpack.c.l.b16 %v1959
        %v2024 = vunpack.c.l.b16 %v1960
        %v2025 = vunpack.c.l.b16 %v1961
        %v2026 = vunpack.c.l.b16 %v1962
        %v2027 = vunpack.c.l.b16 %v1963
        %v2028 = vunpack.c.l.b16 %v1964
        %v2029 = vunpack.c.l.b16 %v1965
        %v2030 = vunpack.c.l.b16 %v1966
        %v2031 = vunpack.c.l.b16 %v1967
        %v2032 = vunpack.c.l.b16 %v1968
        %v2033 = vunpack.c.l.b16 %v1969
        %v2034 = vunpack.c.l.b16 %v1970
        %v2035 = vunpack.c.l.b16 %v1971
        %v2036 = vunpack.c.l.b16 %v1972
        %v2037 = vunpack.c.l.b16 %v1973
        %v2038 = vunpack.c.l.b16 %v1974
        %v2039 = vunpack.c.l.b16 %v1975
        %v2040 = vunpack.c.l.b16 %v1976
        %v2041 = vpack.c.b16 %v2010, %v2009
        %v2042 = vpack.c.b16 %v2012, %v2011
        %v2043 = vpack.c.b16 %v2014, %v2013
        %v2044 = vpack.c.b16 %v2016, %v2015
        %v2045 = vpack.c.b16 %v2018, %v2017
        %v2046 = vpack.c.b16 %v2020, %v2019
        %v2047 = vpack.c.b16 %v2022, %v2021
        %v2048 = vpack.c.b16 %v2024, %v2023
        %v2049 = vpack.c.b16 %v2026, %v2025
        %v2050 = vpack.c.b16 %v2028, %v2027
        %v2051 = vpack.c.b16 %v2030, %v2029
        %v2052 = vpack.c.b16 %v2032, %v2031
        %v2053 = vpack.c.b16 %v2034, %v2033
        %v2054 = vpack.c.b16 %v2036, %v2035
        %v2055 = vpack.c.b16 %v2038, %v2037
        %v2056 = vpack.c.b16 %v2040, %v2039
        %2073 = vmatprep.subr.bf16.mxu0 0
        %2074 = vmatpush1.bf16.msra.mxu0 %v2048
        %2075 = vmatprep.subr.bf16.mxu0 0
        %2076 = vmatpush1.bf16.msra.mxu0 %v2047
        %2077 = vmatprep.subr.bf16.mxu0 0
        %2078 = vmatpush1.bf16.msra.mxu0 %v2046
        %2079 = vmatprep.subr.bf16.mxu0 0
        %2080 = vmatpush1.bf16.msra.mxu0 %v2045
        %2081 = vmatprep.subr.bf16.mxu0 0
        %2082 = vmatpush1.bf16.msra.mxu0 %v2044
        %2083 = vmatprep.subr.bf16.mxu0 0
        %2084 = vmatpush1.bf16.msra.mxu0 %v2043
        %2085 = vmatprep.subr.bf16.mxu0 0
        %2086 = vmatpush1.bf16.msra.mxu0 %v2042
        %2087 = vmatprep.subr.bf16.mxu0 0
        %2088 = vmatpush1.bf16.msra.mxu0 %v2041
        %2089 = vmatprep.subr.bf16.mxu0 0
        %2090 = vmatpush2.bf16.msra.mxu0 %v2056
        %2091 = vmatprep.subr.bf16.mxu0 0
        %2092 = vmatpush2.bf16.msra.mxu0 %v2055
        %2093 = vmatprep.subr.bf16.mxu0 0
        %2094 = vmatpush2.bf16.msra.mxu0 %v2054
        %2095 = vmatprep.subr.bf16.mxu0 0
        %2096 = vmatpush2.bf16.msra.mxu0 %v2053
        %2097 = vmatprep.subr.bf16.mxu0 0
        %2098 = vmatpush2.bf16.msra.mxu0 %v2052
        %2099 = vmatprep.subr.bf16.mxu0 0
        %2100 = vmatpush2.bf16.msra.mxu0 %v2051
        %2101 = vmatprep.subr.bf16.mxu0 0
        %2102 = vmatpush2.bf16.msra.mxu0 %v2050
        %2103 = vmatprep.subr.bf16.mxu0 0
        %2104 = vmatpush2.bf16.msra.mxu0 %v2049
        %2105 = vmatprep.mubr.bf16.mxu0 %v315
        %2106 = vmatmul.mubr.bf16.gmra.mxu0 %v314
        %v2107 = vpop.f32.mrf.mxu0
        %v2108 = vadd.f32 %v309, %v2107
        %v2109 = vpop.f32.mrf.mxu0
        %v2110 = vpop.f32.mrf.mxu0
        %v2111 = vpop.f32.mrf.mxu0
        %2112 = vdwg.mxu0
        %v2113 = vmax.f32 %v2108, 0.0
        %v2114 = vpack.c.bf16 %v2113, %v2113
        %s2115 = scalar_lea.vmem [#allocation7], 384
        %v2116 = vld [vmem:[%s2115] sm:$0xf]
        %v2117 = vld [vmem:[%s2115 + $0x4] sm:$0xf]
        %v2118 = vld [vmem:[%s2115 + $0x8] sm:$0xf]
        %v2119 = vld [vmem:[%s2115 + $0xc] sm:$0xf]
        %v2120 = vld [vmem:[%s2115 + $0x10] sm:$0xf]
        %v2121 = vld [vmem:[%s2115 + $0x14] sm:$0xf]
        %v2122 = vld [vmem:[%s2115 + $0x18] sm:$0xf]
        %v2123 = vld [vmem:[%s2115 + $0x1c] sm:$0xf]
        %v2124 = vld [vmem:[%s2115 + $0x20] sm:$0xf]
        %v2125 = vld [vmem:[%s2115 + $0x24] sm:$0xf]
        %v2126 = vld [vmem:[%s2115 + $0x28] sm:$0xf]
        %v2127 = vld [vmem:[%s2115 + $0x2c] sm:$0xf]
        %v2128 = vld [vmem:[%s2115 + $0x30] sm:$0xf]
        %v2129 = vld [vmem:[%s2115 + $0x34] sm:$0xf]
        %v2130 = vld [vmem:[%s2115 + $0x38] sm:$0xf]
        %v2131 = vld [vmem:[%s2115 + $0x3c] sm:$0xf]
        %v2148 = vunpack.c.l.b16 %v2116
        %v2149 = vunpack.c.l.b16 %v2117
        %v2150 = vunpack.c.l.b16 %v2118
        %v2151 = vunpack.c.l.b16 %v2119
        %v2152 = vunpack.c.l.b16 %v2120
        %v2153 = vunpack.c.l.b16 %v2121
        %v2154 = vunpack.c.l.b16 %v2122
        %v2155 = vunpack.c.l.b16 %v2123
        %v2156 = vunpack.c.l.b16 %v2124
        %v2157 = vunpack.c.l.b16 %v2125
        %v2158 = vunpack.c.l.b16 %v2126
        %v2159 = vunpack.c.l.b16 %v2127
        %v2160 = vunpack.c.l.b16 %v2128
        %v2161 = vunpack.c.l.b16 %v2129
        %v2162 = vunpack.c.l.b16 %v2130
        %v2163 = vunpack.c.l.b16 %v2131
        %v2164 = vpack.c.b16 %v2149, %v2148
        %v2165 = vpack.c.b16 %v2151, %v2150
        %v2166 = vpack.c.b16 %v2153, %v2152
        %v2167 = vpack.c.b16 %v2155, %v2154
        %v2168 = vpack.c.b16 %v2157, %v2156
        %v2169 = vpack.c.b16 %v2159, %v2158
        %v2170 = vpack.c.b16 %v2161, %v2160
        %v2171 = vpack.c.b16 %v2163, %v2162
        %2180 = vmatprep.subr.bf16.mxu0 0
        %2181 = vmatpush1.bf16.msra.mxu0 %v2171
        %2182 = vmatprep.subr.bf16.mxu0 0
        %2183 = vmatpush1.bf16.msra.mxu0 %v2170
        %2184 = vmatprep.subr.bf16.mxu0 0
        %2185 = vmatpush1.bf16.msra.mxu0 %v2169
        %2186 = vmatprep.subr.bf16.mxu0 0
        %2187 = vmatpush1.bf16.msra.mxu0 %v2168
        %2188 = vmatprep.subr.bf16.mxu0 0
        %2189 = vmatpush1.bf16.msra.mxu0 %v2167
        %2190 = vmatprep.subr.bf16.mxu0 0
        %2191 = vmatpush1.bf16.msra.mxu0 %v2166
        %2192 = vmatprep.subr.bf16.mxu0 0
        %2193 = vmatpush1.bf16.msra.mxu0 %v2165
        %2194 = vmatprep.subr.bf16.mxu0 0
        %2195 = vmatpush1.bf16.msra.mxu0 %v2164
        %2196 = vmatprep.subr.bf16.mxu0 0
        %2197 = vmatpush2.bf16.msra.mxu0 0
        %2198 = vmatprep.subr.bf16.mxu0 0
        %2199 = vmatpush2.bf16.msra.mxu0 0
        %2200 = vmatprep.subr.bf16.mxu0 0
        %2201 = vmatpush2.bf16.msra.mxu0 0
        %2202 = vmatprep.subr.bf16.mxu0 0
        %2203 = vmatpush2.bf16.msra.mxu0 0
        %2204 = vmatprep.subr.bf16.mxu0 0
        %2205 = vmatpush2.bf16.msra.mxu0 0
        %2206 = vmatprep.subr.bf16.mxu0 0
        %2207 = vmatpush2.bf16.msra.mxu0 0
        %2208 = vmatprep.subr.bf16.mxu0 0
        %2209 = vmatpush2.bf16.msra.mxu0 0
        %2210 = vmatprep.subr.bf16.mxu0 0
        %2211 = vmatpush2.bf16.msra.mxu0 0
        %2212 = vmatprep.mubr.bf16.mxu0 0
        %2213 = vmatmul.mubr.bf16.gmra.mxu0 %v2114
        %v2214 = vpop.f32.mrf.mxu0
        %v2215 = vadd.f32 0.0, %v2214
        %v2216 = vpop.f32.mrf.mxu0
        %v2217 = vpop.f32.mrf.mxu0
        %v2218 = vpop.f32.mrf.mxu0
        %2219 = vdwg.mxu0
        %v2220 = vadd.f32 %v1943, %v2215
        %s2221 = scalar_lea.vmem [#allocation5], 896
        %v2222 = vld [vmem:[%s2221] sm:$0xf]
        %v2223 = vld [vmem:[%s2221 + $0x4] sm:$0xf]
        %v2224 = vld [vmem:[%s2221 + $0x8] sm:$0xf]
        %v2225 = vld [vmem:[%s2221 + $0xc] sm:$0xf]
        %v2226 = vld [vmem:[%s2221 + $0x10] sm:$0xf]
        %v2227 = vld [vmem:[%s2221 + $0x14] sm:$0xf]
        %v2228 = vld [vmem:[%s2221 + $0x18] sm:$0xf]
        %v2229 = vld [vmem:[%s2221 + $0x1c] sm:$0xf]
        %v2230 = vld [vmem:[%s2221 + $0x20] sm:$0xf]
        %v2231 = vld [vmem:[%s2221 + $0x24] sm:$0xf]
        %v2232 = vld [vmem:[%s2221 + $0x28] sm:$0xf]
        %v2233 = vld [vmem:[%s2221 + $0x2c] sm:$0xf]
        %v2234 = vld [vmem:[%s2221 + $0x30] sm:$0xf]
        %v2235 = vld [vmem:[%s2221 + $0x34] sm:$0xf]
        %v2236 = vld [vmem:[%s2221 + $0x38] sm:$0xf]
        %v2237 = vld [vmem:[%s2221 + $0x3c] sm:$0xf]
        %v2238 = vld [vmem:[%s2221 + $0x40] sm:$0xf]
        %v2239 = vld [vmem:[%s2221 + $0x44] sm:$0xf]
        %v2240 = vld [vmem:[%s2221 + $0x48] sm:$0xf]
        %v2241 = vld [vmem:[%s2221 + $0x4c] sm:$0xf]
        %v2242 = vld [vmem:[%s2221 + $0x50] sm:$0xf]
        %v2243 = vld [vmem:[%s2221 + $0x54] sm:$0xf]
        %v2244 = vld [vmem:[%s2221 + $0x58] sm:$0xf]
        %v2245 = vld [vmem:[%s2221 + $0x5c] sm:$0xf]
        %v2246 = vld [vmem:[%s2221 + $0x60] sm:$0xf]
        %v2247 = vld [vmem:[%s2221 + $0x64] sm:$0xf]
        %v2248 = vld [vmem:[%s2221 + $0x68] sm:$0xf]
        %v2249 = vld [vmem:[%s2221 + $0x6c] sm:$0xf]
        %v2250 = vld [vmem:[%s2221 + $0x70] sm:$0xf]
        %v2251 = vld [vmem:[%s2221 + $0x74] sm:$0xf]
        %v2252 = vld [vmem:[%s2221 + $0x78] sm:$0xf]
        %v2253 = vld [vmem:[%s2221 + $0x7c] sm:$0xf]
        %v2286 = vunpack.c.l.b16 %v2222
        %v2287 = vunpack.c.l.b16 %v2223
        %v2288 = vunpack.c.l.b16 %v2224
        %v2289 = vunpack.c.l.b16 %v2225
        %v2290 = vunpack.c.l.b16 %v2226
        %v2291 = vunpack.c.l.b16 %v2227
        %v2292 = vunpack.c.l.b16 %v2228
        %v2293 = vunpack.c.l.b16 %v2229
        %v2294 = vunpack.c.l.b16 %v2230
        %v2295 = vunpack.c.l.b16 %v2231
        %v2296 = vunpack.c.l.b16 %v2232
        %v2297 = vunpack.c.l.b16 %v2233
        %v2298 = vunpack.c.l.b16 %v2234
        %v2299 = vunpack.c.l.b16 %v2235
        %v2300 = vunpack.c.l.b16 %v2236
        %v2301 = vunpack.c.l.b16 %v2237
        %v2302 = vunpack.c.l.b16 %v2238
        %v2303 = vunpack.c.l.b16 %v2239
        %v2304 = vunpack.c.l.b16 %v2240
        %v2305 = vunpack.c.l.b16 %v2241
        %v2306 = vunpack.c.l.b16 %v2242
        %v2307 = vunpack.c.l.b16 %v2243
        %v2308 = vunpack.c.l.b16 %v2244
        %v2309 = vunpack.c.l.b16 %v2245
        %v2310 = vunpack.c.l.b16 %v2246
        %v2311 = vunpack.c.l.b16 %v2247
        %v2312 = vunpack.c.l.b16 %v2248
        %v2313 = vunpack.c.l.b16 %v2249
        %v2314 = vunpack.c.l.b16 %v2250
        %v2315 = vunpack.c.l.b16 %v2251
        %v2316 = vunpack.c.l.b16 %v2252
        %v2317 = vunpack.c.l.b16 %v2253
        %v2318 = vpack.c.b16 %v2287, %v2286
        %v2319 = vpack.c.b16 %v2289, %v2288
        %v2320 = vpack.c.b16 %v2291, %v2290
        %v2321 = vpack.c.b16 %v2293, %v2292
        %v2322 = vpack.c.b16 %v2295, %v2294
        %v2323 = vpack.c.b16 %v2297, %v2296
        %v2324 = vpack.c.b16 %v2299, %v2298
        %v2325 = vpack.c.b16 %v2301, %v2300
        %v2326 = vpack.c.b16 %v2303, %v2302
        %v2327 = vpack.c.b16 %v2305, %v2304
        %v2328 = vpack.c.b16 %v2307, %v2306
        %v2329 = vpack.c.b16 %v2309, %v2308
        %v2330 = vpack.c.b16 %v2311, %v2310
        %v2331 = vpack.c.b16 %v2313, %v2312
        %v2332 = vpack.c.b16 %v2315, %v2314
        %v2333 = vpack.c.b16 %v2317, %v2316
        %2350 = vmatprep.subr.bf16.mxu0 0
        %2351 = vmatpush1.bf16.msra.mxu0 %v2325
        %2352 = vmatprep.subr.bf16.mxu0 0
        %2353 = vmatpush1.bf16.msra.mxu0 %v2324
        %2354 = vmatprep.subr.bf16.mxu0 0
        %2355 = vmatpush1.bf16.msra.mxu0 %v2323
        %2356 = vmatprep.subr.bf16.mxu0 0
        %2357 = vmatpush1.bf16.msra.mxu0 %v2322
        %2358 = vmatprep.subr.bf16.mxu0 0
        %2359 = vmatpush1.bf16.msra.mxu0 %v2321
        %2360 = vmatprep.subr.bf16.mxu0 0
        %2361 = vmatpush1.bf16.msra.mxu0 %v2320
        %2362 = vmatprep.subr.bf16.mxu0 0
        %2363 = vmatpush1.bf16.msra.mxu0 %v2319
        %2364 = vmatprep.subr.bf16.mxu0 0
        %2365 = vmatpush1.bf16.msra.mxu0 %v2318
        %2366 = vmatprep.subr.bf16.mxu0 0
        %2367 = vmatpush2.bf16.msra.mxu0 %v2333
        %2368 = vmatprep.subr.bf16.mxu0 0
        %2369 = vmatpush2.bf16.msra.mxu0 %v2332
        %2370 = vmatprep.subr.bf16.mxu0 0
        %2371 = vmatpush2.bf16.msra.mxu0 %v2331
        %2372 = vmatprep.subr.bf16.mxu0 0
        %2373 = vmatpush2.bf16.msra.mxu0 %v2330
        %2374 = vmatprep.subr.bf16.mxu0 0
        %2375 = vmatpush2.bf16.msra.mxu0 %v2329
        %2376 = vmatprep.subr.bf16.mxu0 0
        %2377 = vmatpush2.bf16.msra.mxu0 %v2328
        %2378 = vmatprep.subr.bf16.mxu0 0
        %2379 = vmatpush2.bf16.msra.mxu0 %v2327
        %2380 = vmatprep.subr.bf16.mxu0 0
        %2381 = vmatpush2.bf16.msra.mxu0 %v2326
        %2382 = vmatprep.mubr.bf16.mxu0 %v315
        %2383 = vmatmul.mubr.bf16.gmra.mxu0 %v314
        %v2384 = vpop.f32.mrf.mxu0
        %v2385 = vadd.f32 %v309, %v2384
        %v2386 = vpop.f32.mrf.mxu0
        %v2387 = vpop.f32.mrf.mxu0
        %v2388 = vpop.f32.mrf.mxu0
        %2389 = vdwg.mxu0
        %v2390 = vmax.f32 %v2385, 0.0
        %v2391 = vpack.c.bf16 %v2390, %v2390
        %s2392 = scalar_lea.vmem [#allocation7], 448
        %v2393 = vld [vmem:[%s2392] sm:$0xf]
        %v2394 = vld [vmem:[%s2392 + $0x4] sm:$0xf]
        %v2395 = vld [vmem:[%s2392 + $0x8] sm:$0xf]
        %v2396 = vld [vmem:[%s2392 + $0xc] sm:$0xf]
        %v2397 = vld [vmem:[%s2392 + $0x10] sm:$0xf]
        %v2398 = vld [vmem:[%s2392 + $0x14] sm:$0xf]
        %v2399 = vld [vmem:[%s2392 + $0x18] sm:$0xf]
        %v2400 = vld [vmem:[%s2392 + $0x1c] sm:$0xf]
        %v2401 = vld [vmem:[%s2392 + $0x20] sm:$0xf]
        %v2402 = vld [vmem:[%s2392 + $0x24] sm:$0xf]
        %v2403 = vld [vmem:[%s2392 + $0x28] sm:$0xf]
        %v2404 = vld [vmem:[%s2392 + $0x2c] sm:$0xf]
        %v2405 = vld [vmem:[%s2392 + $0x30] sm:$0xf]
        %v2406 = vld [vmem:[%s2392 + $0x34] sm:$0xf]
        %v2407 = vld [vmem:[%s2392 + $0x38] sm:$0xf]
        %v2408 = vld [vmem:[%s2392 + $0x3c] sm:$0xf]
        %v2425 = vunpack.c.l.b16 %v2393
        %v2426 = vunpack.c.l.b16 %v2394
        %v2427 = vunpack.c.l.b16 %v2395
        %v2428 = vunpack.c.l.b16 %v2396
        %v2429 = vunpack.c.l.b16 %v2397
        %v2430 = vunpack.c.l.b16 %v2398
        %v2431 = vunpack.c.l.b16 %v2399
        %v2432 = vunpack.c.l.b16 %v2400
        %v2433 = vunpack.c.l.b16 %v2401
        %v2434 = vunpack.c.l.b16 %v2402
        %v2435 = vunpack.c.l.b16 %v2403
        %v2436 = vunpack.c.l.b16 %v2404
        %v2437 = vunpack.c.l.b16 %v2405
        %v2438 = vunpack.c.l.b16 %v2406
        %v2439 = vunpack.c.l.b16 %v2407
        %v2440 = vunpack.c.l.b16 %v2408
        %v2441 = vpack.c.b16 %v2426, %v2425
        %v2442 = vpack.c.b16 %v2428, %v2427
        %v2443 = vpack.c.b16 %v2430, %v2429
        %v2444 = vpack.c.b16 %v2432, %v2431
        %v2445 = vpack.c.b16 %v2434, %v2433
        %v2446 = vpack.c.b16 %v2436, %v2435
        %v2447 = vpack.c.b16 %v2438, %v2437
        %v2448 = vpack.c.b16 %v2440, %v2439
        %2457 = vmatprep.subr.bf16.mxu0 0
        %2458 = vmatpush1.bf16.msra.mxu0 %v2448
        %2459 = vmatprep.subr.bf16.mxu0 0
        %2460 = vmatpush1.bf16.msra.mxu0 %v2447
        %2461 = vmatprep.subr.bf16.mxu0 0
        %2462 = vmatpush1.bf16.msra.mxu0 %v2446
        %2463 = vmatprep.subr.bf16.mxu0 0
        %2464 = vmatpush1.bf16.msra.mxu0 %v2445
        %2465 = vmatprep.subr.bf16.mxu0 0
        %2466 = vmatpush1.bf16.msra.mxu0 %v2444
        %2467 = vmatprep.subr.bf16.mxu0 0
        %2468 = vmatpush1.bf16.msra.mxu0 %v2443
        %2469 = vmatprep.subr.bf16.mxu0 0
        %2470 = vmatpush1.bf16.msra.mxu0 %v2442
        %2471 = vmatprep.subr.bf16.mxu0 0
        %2472 = vmatpush1.bf16.msra.mxu0 %v2441
        %2473 = vmatprep.subr.bf16.mxu0 0
        %2474 = vmatpush2.bf16.msra.mxu0 0
        %2475 = vmatprep.subr.bf16.mxu0 0
        %2476 = vmatpush2.bf16.msra.mxu0 0
        %2477 = vmatprep.subr.bf16.mxu0 0
        %2478 = vmatpush2.bf16.msra.mxu0 0
        %2479 = vmatprep.subr.bf16.mxu0 0
        %2480 = vmatpush2.bf16.msra.mxu0 0
        %2481 = vmatprep.subr.bf16.mxu0 0
        %2482 = vmatpush2.bf16.msra.mxu0 0
        %2483 = vmatprep.subr.bf16.mxu0 0
        %2484 = vmatpush2.bf16.msra.mxu0 0
        %2485 = vmatprep.subr.bf16.mxu0 0
        %2486 = vmatpush2.bf16.msra.mxu0 0
        %2487 = vmatprep.subr.bf16.mxu0 0
        %2488 = vmatpush2.bf16.msra.mxu0 0
        %2489 = vmatprep.mubr.bf16.mxu0 0
        %2490 = vmatmul.mubr.bf16.gmra.mxu0 %v2391
        %v2491 = vpop.f32.mrf.mxu0
        %v2492 = vadd.f32 0.0, %v2491
        %v2493 = vpop.f32.mrf.mxu0
        %v2494 = vpop.f32.mrf.mxu0
        %v2495 = vpop.f32.mrf.mxu0
        %2496 = vdwg.mxu0
        %v2497 = vadd.f32 %v2220, %v2492
        %s2498 = scalar_lea.vmem [#allocation5], 1024
        %v2499 = vld [vmem:[%s2498] sm:$0xf]
        %v2500 = vld [vmem:[%s2498 + $0x4] sm:$0xf]
        %v2501 = vld [vmem:[%s2498 + $0x8] sm:$0xf]
        %v2502 = vld [vmem:[%s2498 + $0xc] sm:$0xf]
        %v2503 = vld [vmem:[%s2498 + $0x10] sm:$0xf]
        %v2504 = vld [vmem:[%s2498 + $0x14] sm:$0xf]
        %v2505 = vld [vmem:[%s2498 + $0x18] sm:$0xf]
        %v2506 = vld [vmem:[%s2498 + $0x1c] sm:$0xf]
        %v2507 = vld [vmem:[%s2498 + $0x20] sm:$0xf]
        %v2508 = vld [vmem:[%s2498 + $0x24] sm:$0xf]
        %v2509 = vld [vmem:[%s2498 + $0x28] sm:$0xf]
        %v2510 = vld [vmem:[%s2498 + $0x2c] sm:$0xf]
        %v2511 = vld [vmem:[%s2498 + $0x30] sm:$0xf]
        %v2512 = vld [vmem:[%s2498 + $0x34] sm:$0xf]
        %v2513 = vld [vmem:[%s2498 + $0x38] sm:$0xf]
        %v2514 = vld [vmem:[%s2498 + $0x3c] sm:$0xf]
        %v2515 = vld [vmem:[%s2498 + $0x40] sm:$0xf]
        %v2516 = vld [vmem:[%s2498 + $0x44] sm:$0xf]
        %v2517 = vld [vmem:[%s2498 + $0x48] sm:$0xf]
        %v2518 = vld [vmem:[%s2498 + $0x4c] sm:$0xf]
        %v2519 = vld [vmem:[%s2498 + $0x50] sm:$0xf]
        %v2520 = vld [vmem:[%s2498 + $0x54] sm:$0xf]
        %v2521 = vld [vmem:[%s2498 + $0x58] sm:$0xf]
        %v2522 = vld [vmem:[%s2498 + $0x5c] sm:$0xf]
        %v2523 = vld [vmem:[%s2498 + $0x60] sm:$0xf]
        %v2524 = vld [vmem:[%s2498 + $0x64] sm:$0xf]
        %v2525 = vld [vmem:[%s2498 + $0x68] sm:$0xf]
        %v2526 = vld [vmem:[%s2498 + $0x6c] sm:$0xf]
        %v2527 = vld [vmem:[%s2498 + $0x70] sm:$0xf]
        %v2528 = vld [vmem:[%s2498 + $0x74] sm:$0xf]
        %v2529 = vld [vmem:[%s2498 + $0x78] sm:$0xf]
        %v2530 = vld [vmem:[%s2498 + $0x7c] sm:$0xf]
        %v2563 = vunpack.c.l.b16 %v2499
        %v2564 = vunpack.c.l.b16 %v2500
        %v2565 = vunpack.c.l.b16 %v2501
        %v2566 = vunpack.c.l.b16 %v2502
        %v2567 = vunpack.c.l.b16 %v2503
        %v2568 = vunpack.c.l.b16 %v2504
        %v2569 = vunpack.c.l.b16 %v2505
        %v2570 = vunpack.c.l.b16 %v2506
        %v2571 = vunpack.c.l.b16 %v2507
        %v2572 = vunpack.c.l.b16 %v2508
        %v2573 = vunpack.c.l.b16 %v2509
        %v2574 = vunpack.c.l.b16 %v2510
        %v2575 = vunpack.c.l.b16 %v2511
        %v2576 = vunpack.c.l.b16 %v2512
        %v2577 = vunpack.c.l.b16 %v2513
        %v2578 = vunpack.c.l.b16 %v2514
        %v2579 = vunpack.c.l.b16 %v2515
        %v2580 = vunpack.c.l.b16 %v2516
        %v2581 = vunpack.c.l.b16 %v2517
        %v2582 = vunpack.c.l.b16 %v2518
        %v2583 = vunpack.c.l.b16 %v2519
        %v2584 = vunpack.c.l.b16 %v2520
        %v2585 = vunpack.c.l.b16 %v2521
        %v2586 = vunpack.c.l.b16 %v2522
        %v2587 = vunpack.c.l.b16 %v2523
        %v2588 = vunpack.c.l.b16 %v2524
        %v2589 = vunpack.c.l.b16 %v2525
        %v2590 = vunpack.c.l.b16 %v2526
        %v2591 = vunpack.c.l.b16 %v2527
        %v2592 = vunpack.c.l.b16 %v2528
        %v2593 = vunpack.c.l.b16 %v2529
        %v2594 = vunpack.c.l.b16 %v2530
        %v2595 = vpack.c.b16 %v2564, %v2563
        %v2596 = vpack.c.b16 %v2566, %v2565
        %v2597 = vpack.c.b16 %v2568, %v2567
        %v2598 = vpack.c.b16 %v2570, %v2569
        %v2599 = vpack.c.b16 %v2572, %v2571
        %v2600 = vpack.c.b16 %v2574, %v2573
        %v2601 = vpack.c.b16 %v2576, %v2575
        %v2602 = vpack.c.b16 %v2578, %v2577
        %v2603 = vpack.c.b16 %v2580, %v2579
        %v2604 = vpack.c.b16 %v2582, %v2581
        %v2605 = vpack.c.b16 %v2584, %v2583
        %v2606 = vpack.c.b16 %v2586, %v2585
        %v2607 = vpack.c.b16 %v2588, %v2587
        %v2608 = vpack.c.b16 %v2590, %v2589
        %v2609 = vpack.c.b16 %v2592, %v2591
        %v2610 = vpack.c.b16 %v2594, %v2593
        %2627 = vmatprep.subr.bf16.mxu0 0
        %2628 = vmatpush1.bf16.msra.mxu0 %v2602
        %2629 = vmatprep.subr.bf16.mxu0 0
        %2630 = vmatpush1.bf16.msra.mxu0 %v2601
        %2631 = vmatprep.subr.bf16.mxu0 0
        %2632 = vmatpush1.bf16.msra.mxu0 %v2600
        %2633 = vmatprep.subr.bf16.mxu0 0
        %2634 = vmatpush1.bf16.msra.mxu0 %v2599
        %2635 = vmatprep.subr.bf16.mxu0 0
        %2636 = vmatpush1.bf16.msra.mxu0 %v2598
        %2637 = vmatprep.subr.bf16.mxu0 0
        %2638 = vmatpush1.bf16.msra.mxu0 %v2597
        %2639 = vmatprep.subr.bf16.mxu0 0
        %2640 = vmatpush1.bf16.msra.mxu0 %v2596
        %2641 = vmatprep.subr.bf16.mxu0 0
        %2642 = vmatpush1.bf16.msra.mxu0 %v2595
        %2643 = vmatprep.subr.bf16.mxu0 0
        %2644 = vmatpush2.bf16.msra.mxu0 %v2610
        %2645 = vmatprep.subr.bf16.mxu0 0
        %2646 = vmatpush2.bf16.msra.mxu0 %v2609
        %2647 = vmatprep.subr.bf16.mxu0 0
        %2648 = vmatpush2.bf16.msra.mxu0 %v2608
        %2649 = vmatprep.subr.bf16.mxu0 0
        %2650 = vmatpush2.bf16.msra.mxu0 %v2607
        %2651 = vmatprep.subr.bf16.mxu0 0
        %2652 = vmatpush2.bf16.msra.mxu0 %v2606
        %2653 = vmatprep.subr.bf16.mxu0 0
        %2654 = vmatpush2.bf16.msra.mxu0 %v2605
        %2655 = vmatprep.subr.bf16.mxu0 0
        %2656 = vmatpush2.bf16.msra.mxu0 %v2604
        %2657 = vmatprep.subr.bf16.mxu0 0
        %2658 = vmatpush2.bf16.msra.mxu0 %v2603
        %2659 = vmatprep.mubr.bf16.mxu0 %v315
        %2660 = vmatmul.mubr.bf16.gmra.mxu0 %v314
        %v2661 = vpop.f32.mrf.mxu0
        %v2662 = vadd.f32 %v309, %v2661
        %v2663 = vpop.f32.mrf.mxu0
        %v2664 = vpop.f32.mrf.mxu0
        %v2665 = vpop.f32.mrf.mxu0
        %2666 = vdwg.mxu0
        %v2667 = vmax.f32 %v2662, 0.0
        %v2668 = vpack.c.bf16 %v2667, %v2667
        %s2669 = scalar_lea.vmem [#allocation7], 512
        %v2670 = vld [vmem:[%s2669] sm:$0xf]
        %v2671 = vld [vmem:[%s2669 + $0x4] sm:$0xf]
        %v2672 = vld [vmem:[%s2669 + $0x8] sm:$0xf]
        %v2673 = vld [vmem:[%s2669 + $0xc] sm:$0xf]
        %v2674 = vld [vmem:[%s2669 + $0x10] sm:$0xf]
        %v2675 = vld [vmem:[%s2669 + $0x14] sm:$0xf]
        %v2676 = vld [vmem:[%s2669 + $0x18] sm:$0xf]
        %v2677 = vld [vmem:[%s2669 + $0x1c] sm:$0xf]
        %v2678 = vld [vmem:[%s2669 + $0x20] sm:$0xf]
        %v2679 = vld [vmem:[%s2669 + $0x24] sm:$0xf]
        %v2680 = vld [vmem:[%s2669 + $0x28] sm:$0xf]
        %v2681 = vld [vmem:[%s2669 + $0x2c] sm:$0xf]
        %v2682 = vld [vmem:[%s2669 + $0x30] sm:$0xf]
        %v2683 = vld [vmem:[%s2669 + $0x34] sm:$0xf]
        %v2684 = vld [vmem:[%s2669 + $0x38] sm:$0xf]
        %v2685 = vld [vmem:[%s2669 + $0x3c] sm:$0xf]
        %v2702 = vunpack.c.l.b16 %v2670
        %v2703 = vunpack.c.l.b16 %v2671
        %v2704 = vunpack.c.l.b16 %v2672
        %v2705 = vunpack.c.l.b16 %v2673
        %v2706 = vunpack.c.l.b16 %v2674
        %v2707 = vunpack.c.l.b16 %v2675
        %v2708 = vunpack.c.l.b16 %v2676
        %v2709 = vunpack.c.l.b16 %v2677
        %v2710 = vunpack.c.l.b16 %v2678
        %v2711 = vunpack.c.l.b16 %v2679
        %v2712 = vunpack.c.l.b16 %v2680
        %v2713 = vunpack.c.l.b16 %v2681
        %v2714 = vunpack.c.l.b16 %v2682
        %v2715 = vunpack.c.l.b16 %v2683
        %v2716 = vunpack.c.l.b16 %v2684
        %v2717 = vunpack.c.l.b16 %v2685
        %v2718 = vpack.c.b16 %v2703, %v2702
        %v2719 = vpack.c.b16 %v2705, %v2704
        %v2720 = vpack.c.b16 %v2707, %v2706
        %v2721 = vpack.c.b16 %v2709, %v2708
        %v2722 = vpack.c.b16 %v2711, %v2710
        %v2723 = vpack.c.b16 %v2713, %v2712
        %v2724 = vpack.c.b16 %v2715, %v2714
        %v2725 = vpack.c.b16 %v2717, %v2716
        %2734 = vmatprep.subr.bf16.mxu0 0
        %2735 = vmatpush1.bf16.msra.mxu0 %v2725
        %2736 = vmatprep.subr.bf16.mxu0 0
        %2737 = vmatpush1.bf16.msra.mxu0 %v2724
        %2738 = vmatprep.subr.bf16.mxu0 0
        %2739 = vmatpush1.bf16.msra.mxu0 %v2723
        %2740 = vmatprep.subr.bf16.mxu0 0
        %2741 = vmatpush1.bf16.msra.mxu0 %v2722
        %2742 = vmatprep.subr.bf16.mxu0 0
        %2743 = vmatpush1.bf16.msra.mxu0 %v2721
        %2744 = vmatprep.subr.bf16.mxu0 0
        %2745 = vmatpush1.bf16.msra.mxu0 %v2720
        %2746 = vmatprep.subr.bf16.mxu0 0
        %2747 = vmatpush1.bf16.msra.mxu0 %v2719
        %2748 = vmatprep.subr.bf16.mxu0 0
        %2749 = vmatpush1.bf16.msra.mxu0 %v2718
        %2750 = vmatprep.subr.bf16.mxu0 0
        %2751 = vmatpush2.bf16.msra.mxu0 0
        %2752 = vmatprep.subr.bf16.mxu0 0
        %2753 = vmatpush2.bf16.msra.mxu0 0
        %2754 = vmatprep.subr.bf16.mxu0 0
        %2755 = vmatpush2.bf16.msra.mxu0 0
        %2756 = vmatprep.subr.bf16.mxu0 0
        %2757 = vmatpush2.bf16.msra.mxu0 0
        %2758 = vmatprep.subr.bf16.mxu0 0
        %2759 = vmatpush2.bf16.msra.mxu0 0
        %2760 = vmatprep.subr.bf16.mxu0 0
        %2761 = vmatpush2.bf16.msra.mxu0 0
        %2762 = vmatprep.subr.bf16.mxu0 0
        %2763 = vmatpush2.bf16.msra.mxu0 0
        %2764 = vmatprep.subr.bf16.mxu0 0
        %2765 = vmatpush2.bf16.msra.mxu0 0
        %2766 = vmatprep.mubr.bf16.mxu0 0
        %2767 = vmatmul.mubr.bf16.gmra.mxu0 %v2668
        %v2768 = vpop.f32.mrf.mxu0
        %v2769 = vadd.f32 0.0, %v2768
        %v2770 = vpop.f32.mrf.mxu0
        %v2771 = vpop.f32.mrf.mxu0
        %v2772 = vpop.f32.mrf.mxu0
        %2773 = vdwg.mxu0
        %v2774 = vadd.f32 %v2497, %v2769
        %v2775 = vld [vmem:[%s4] sm:$0x1]
        %v2777 = vlaneseq
        %v2778 = vshrl.u32 %v2777, 7
        %v2779 = vsub.s32 0, %v2778
        %v2780 = vrot.slane %v2775, %v2779
        %v2782 = vadd.f32 %v2774, %v2780
        %2783 = vst [vmem:[%s269] sm:$0xff] %v2782
        %s2784 = sand.u32 %s141, 1
        %s2785 = scalar_lea.sflag [#allocation4], %s2784
        %s2786 = sand.u32 %s141, 1
        %s2787 = smul.addr %s2786, 8
        %s2788 = scalar_lea.vmem [#allocation8], %s2787
        // Predicated region
        $region53: #{tpu_custom_call.1} parent=39 // pred_check
          %p2789 = pneg %p151
        $region54: #{tpu_custom_call.1} parent=39 // pred_check_branch
          %2791 = sbr.rel (%p2789) target = $region56
        $region55: #{tpu_custom_call.1} parent=39 // pred_region
          %s2793 = ssub.s32 128, 128
          %2794 = vsyncadd %s2785, %s2793
          %s2795 = smul.addr %s23, 128
          %s2796 = scalar_lea.hbm %s5, %s2795
          %s2798 = sshll.u32 %s2788, 4
          %s2799 = int_to_ptr.vmem [resolvable:$true] %s2798
          %2801 = dma.vmem_to_hbm [thread:$0]  %s2799, 128, %s2796, %s2785
        $region56: #{tpu_custom_call.1} parent=39 // pred_fallthru
          _
      $region40: #{tpu_custom_call.1} parent=5 // pred_fallthru
        _
      %p2802 = scmp.le.s32.totalorder 2, %s18
      // Predicated region
      $region57: #{tpu_custom_call.1} parent=5 // pred_check
        %p2803 = pneg %p2802
      $region58: #{tpu_custom_call.1} parent=5 // pred_check_branch
        %2805 = sbr.rel (%p2803) target = $region60
      $region59: #{tpu_custom_call.1} parent=5 // pred_region
        %s2806 = ssub.s32 %s18, 2
        // Predicated region
        $region61: #{tpu_custom_call.1} parent=59 // pred_check
          %p2807 = pneg %p157
        $region62: #{tpu_custom_call.1} parent=59 // pred_check_branch
          %2809 = sbr.rel (%p2807) target = $region64
        $region63: #{tpu_custom_call.1} parent=59 // pred_region
          %s2810 = sand.u32 %s142, 1
          %s2811 = scalar_lea.sflag [#allocation4], %s2810
          %s2812 = sand.u32 %s142, 1
          %s2813 = smul.addr %s2812, 8
          %s2814 = scalar_lea.vmem [#allocation8], %s2813
          %2815 = dma.done %s2811, 128
        $region64: #{tpu_custom_call.1} parent=59 // pred_fallthru
          _
      $region60: #{tpu_custom_call.1} parent=5 // pred_fallthru
        _
    $region6: #{tpu_custom_call.1} parent=1 // loop_footer
      %s22 = sadd.s32 1, %s18
    $region7: #{tpu_custom_call.1} parent=1 // loop_footer_branch
      %17 = sbr.rel target = $region3
    $region8: #{tpu_custom_call.1} parent=1 // loop_exit
      _
    %2816 = vsyncpa [#allocation3], 1
    %s2817 = scalar_lea.sflag [#allocation3], 1
    %2818 = vsyncpa %s2817, 1
    %2819 = vsyncpa [#allocation6], 1
    %2820 = vsyncpa [#allocation4], 1
    %s2821 = scalar_lea.sflag [#allocation4], 1
    %2822 = vsyncpa %s2821, 1

</llo_original>
